<compile_context>
chip_gen: v5e
topology: v5e:2x2
jax: 0.10.0
libtpu: 0.0.40
codegen_flags: <defaults>
</compile_context>

<pallas_src>
import functools

import jax
import jax.numpy as jnp
import numpy as np
from jax.experimental import pallas as pl
from jax.experimental.pallas import tpu as pltpu


def _round_up(x, m):
    return (x + m - 1) // m * m


def _trunk_layout(past, units):
    """Row offsets of the packed per-block trunk slab (all multiples of 8)."""
    past_p = _round_up(past, 8)
    o_w1 = 0
    o_b1 = past_p
    o_w2 = o_b1 + 8
    o_b2 = o_w2 + units
    o_w3 = o_b2 + 8
    o_b3 = o_w3 + units
    o_w4 = o_b3 + 8
    o_b4 = o_w4 + units
    rows = o_b4 + 8
    return dict(w1=o_w1, b1=o_b1, w2=o_w2, b2=o_b2, w3=o_w3, b3=o_b3,
                w4=o_w4, b4=o_b4, rows=rows)


# ----------------------------- Pallas kernel --------------------------------
def _nbeats_kernel(x_ref, trunk_hbm, web_ref, wef_ref, bb_ref, bf_ref,
                   fore_ref, trunk_buf, sem, *, past, units):
    nb = web_ref.shape[0]
    B = x_ref.shape[0]
    future = fore_ref.shape[1]
    lay = _trunk_layout(past, units)

    # Kick off ALL per-block trunk-weight DMAs up-front (HBM -> VMEM scratch),
    # one contiguous descriptor per block.  Block 0's compute starts as soon
    # as its ~216 KiB slab lands; the remaining ~1 MiB streams in behind the
    # MXU work of earlier blocks instead of being exposed in the prologue.
    copies = [pltpu.make_async_copy(trunk_hbm.at[i], trunk_buf.at[i], sem.at[i])
              for i in range(nb)]
    for cp in copies:
        cp.start()

    backcast = x_ref[...]                                  # (B, past)
    forecast = jnp.zeros((B, future), jnp.float32)

    def layer(v, i, w_off, w_rows, b_off):
        w = trunk_buf[i, w_off:w_off + w_rows, :]          # static view
        b = trunk_buf[i, b_off:b_off + 1, :]               # (1, units)
        y = jnp.dot(v, w, preferred_element_type=jnp.float32) + b
        return jnp.maximum(y, 0.0)

    # Statically unrolled block loop: every slice below is a static view and
    # the scheduler can overlap weight streaming with adjacent-block compute.
    for i in range(nb):
        copies[i].wait()                                   # block i slab ready
        h = layer(backcast, i, lay["w1"], past, lay["b1"])   # (B, units)
        h = layer(h, i, lay["w2"], units, lay["b2"])
        h = layer(h, i, lay["w3"], units, lay["b3"])
        h = layer(h, i, lay["w4"], units, lay["b4"])
        # Pre-fused heads (W_eff = W_theta @ W_head, computed once outside).
        bck = jnp.dot(h, web_ref[i], preferred_element_type=jnp.float32) + bb_ref[i]
        fct = jnp.dot(h, wef_ref[i], preferred_element_type=jnp.float32) + bf_ref[i]
        backcast = backcast - bck
        forecast = forecast + fct

    fore_ref[...] = forecast                               # single final store


# --------------------- one-time parameter preparation ------------------------
def prepare_params(params):
    """Pack trunk weights into one HBM slab per block and pre-fuse the tail.

    Done once, outside the forward pass (hoisted per the perf review)."""
    (w1, b1, w2, b2, w3, b3, w4, b4, wtb, wtf, wbk, bbk, wfc, bfc) = params
    nb, past, units = w1.shape
    lay = _trunk_layout(past, units)

    trunk = jnp.zeros((nb, lay["rows"], units), jnp.float32)
    trunk = trunk.at[:, lay["w1"]:lay["w1"] + past, :].set(w1)
    trunk = trunk.at[:, lay["b1"]:lay["b1"] + 1, :].set(b1)
    trunk = trunk.at[:, lay["w2"]:lay["w2"] + units, :].set(w2)
    trunk = trunk.at[:, lay["b2"]:lay["b2"] + 1, :].set(b2)
    trunk = trunk.at[:, lay["w3"]:lay["w3"] + units, :].set(w3)
    trunk = trunk.at[:, lay["b3"]:lay["b3"] + 1, :].set(b3)
    trunk = trunk.at[:, lay["w4"]:lay["w4"] + units, :].set(w4)
    trunk = trunk.at[:, lay["b4"]:lay["b4"] + 1, :].set(b4)

    # Tail pre-fusion: h @ (W_theta @ W_head) == (h @ W_theta) @ W_head up to
    # f32 re-association (checked against the unfused reference below).
    w_eff_b = jnp.matmul(wtb, wbk)                         # (nb, units, past)
    w_eff_f = jnp.matmul(wtf, wfc)                         # (nb, units, future)
    return trunk, w_eff_b, w_eff_f, bbk, bfc


# ------------------------------- forward -------------------------------------
@jax.jit
def nbeats_forward(x, trunk, w_eff_b, w_eff_f, bias_b, bias_f):
    """x: (B, past_seq_len, 1) float32  ->  (B, future_seq_len, 1) float32."""
    B, past, _ = x.shape
    nb, units, _ = w_eff_b.shape
    future = w_eff_f.shape[2]
    rows = trunk.shape[1]

    x2 = x[..., 0]                                         # (B, past)  glue

    vmem = lambda: pl.BlockSpec(memory_space=pltpu.MemorySpace.VMEM)
    kern = functools.partial(_nbeats_kernel, past=past, units=units)

    fore = pl.pallas_call(
        kern,
        out_shape=jax.ShapeDtypeStruct((B, future), jnp.float32),
        in_specs=[vmem(),                                  # x (tiny)
                  pl.BlockSpec(memory_space=pl.ANY),       # trunk weights: HBM
                  vmem(), vmem(), vmem(), vmem()],         # fused heads (~75 KiB)
        out_specs=vmem(),
        scratch_shapes=[pltpu.VMEM((nb, rows, units), jnp.float32),
                        pltpu.SemaphoreType.DMA((nb,))],
    )(x2, trunk, w_eff_b, w_eff_f, bias_b, bias_f)

    return fore[:, :, None]                                # (B, future, 1)


# --------------------------- parameter construction --------------------------
def make_params(key, *, past, future, units, stack_types, nb_blocks_per_stack,
                thetas_dim):
    """Deterministic synthetic parameters, stacked over all blocks."""
    td_max = max(thetas_dim)
    n_blocks = len(stack_types) * nb_blocks_per_stack

    w1, b1, w2, b2, w3, b3, w4, b4 = ([] for _ in range(8))
    wtb, wtf, wbk, bbk, wfc, bfc = ([] for _ in range(6))

    def init(k, shape, fan_in):
        return jax.random.normal(k, shape, jnp.float32) / np.sqrt(fan_in)

    keys = jax.random.split(key, n_blocks * 14)
    ki = 0
    for stack_id in range(len(stack_types)):
        td = thetas_dim[stack_id]
        for _ in range(nb_blocks_per_stack):
            w1.append(init(keys[ki], (past, units), past)); ki += 1
            b1.append(init(keys[ki], (1, units), past)); ki += 1
            w2.append(init(keys[ki], (units, units), units)); ki += 1
            b2.append(init(keys[ki], (1, units), units)); ki += 1
            w3.append(init(keys[ki], (units, units), units)); ki += 1
            b3.append(init(keys[ki], (1, units), units)); ki += 1
            w4.append(init(keys[ki], (units, units), units)); ki += 1
            b4.append(init(keys[ki], (1, units), units)); ki += 1
            # theta projections (bias-free), zero-padded td -> td_max (out dim)
            tb = jnp.zeros((units, td_max), jnp.float32).at[:, :td].set(
                init(keys[ki], (units, td), units)); ki += 1
            tf = jnp.zeros((units, td_max), jnp.float32).at[:, :td].set(
                init(keys[ki], (units, td), units)); ki += 1
            wtb.append(tb); wtf.append(tf)
            # heads, zero-padded td -> td_max (in dim)
            bk = jnp.zeros((td_max, past), jnp.float32).at[:td, :].set(
                init(keys[ki], (td, past), td)); ki += 1
            fc = jnp.zeros((td_max, future), jnp.float32).at[:td, :].set(
                init(keys[ki], (td, future), td)); ki += 1
            wbk.append(bk); wfc.append(fc)
            bbk.append(init(keys[ki], (1, past), td)); ki += 1
            bfc.append(init(keys[ki], (1, future), td)); ki += 1

    stack = lambda xs: jnp.stack(xs, axis=0)
    return tuple(map(stack, (w1, b1, w2, b2, w3, b3, w4, b4,
                             wtb, wtf, wbk, bbk, wfc, bfc)))


# ------------------------------ pure-JAX reference ---------------------------
def nbeats_reference(x, params):
    (w1, b1, w2, b2, w3, b3, w4, b4, wtb, wtf, wbk, bbk, wfc, bfc) = params
    nb = w1.shape[0]
    backcast = x[..., 0]
    forecast = jnp.zeros((x.shape[0], wfc.shape[2]), jnp.float32)
    for i in range(nb):
        h = jax.nn.relu(backcast @ w1[i] + b1[i])
        h = jax.nn.relu(h @ w2[i] + b2[i])
        h = jax.nn.relu(h @ w3[i] + b3[i])
        h = jax.nn.relu(h @ w4[i] + b4[i])
        b = (h @ wtb[i]) @ wbk[i] + bbk[i]
        f = (h @ wtf[i]) @ wfc[i] + bfc[i]
        backcast = backcast - b
        forecast = forecast + f
    return forecast[:, :, None]


# ----------------------------------- main ------------------------------------
if __name__ == "__main__":
    # NBeatsNet(past_seq_len=16, future_seq_len=8,
    #           stack_types=('generic','generic'), nb_blocks_per_stack=3,
    #           thetas_dim=(4, 8), hidden_layer_units=128)
    B = 8
    PAST, FUTURE = 16, 8
    UNITS = 128
    STACKS = ("generic", "generic")
    BLOCKS_PER_STACK = 3
    THETAS = (4, 8)

    key = jax.random.PRNGKey(0)
    kx, kp = jax.random.split(key)
    x = jax.random.normal(kx, (B, PAST, 1), jnp.float32)

    params = make_params(kp, past=PAST, future=FUTURE, units=UNITS,
                         stack_types=STACKS,
                         nb_blocks_per_stack=BLOCKS_PER_STACK,
                         thetas_dim=THETAS)

    # One-time pack + pre-fuse (hoisted out of the forward pass).
    trunk, w_eff_b, w_eff_f, bias_b, bias_f = jax.block_until_ready(
        prepare_params(params))

    out = nbeats_forward(x, trunk, w_eff_b, w_eff_f, bias_b, bias_f)
    out = jax.block_until_ready(out)

    ref = nbeats_reference(x, params)
    np.testing.assert_allclose(np.asarray(out), np.asarray(ref),
                               rtol=1e-4, atol=1e-4)
    assert out.shape == (B, FUTURE, 1)
    print("KERNEL_OK")
</pallas_src>

<mosaic_0001>
module attributes {stable_mosaic.version = 11 : i64} {
  func.func @_nbeats_kernel(%arg0: memref<8x16xf32, #tpu.memory_space<vmem>>, %arg1: memref<6x432x128xf32, #tpu.memory_space<any>>, %arg2: memref<6x128x16xf32, #tpu.memory_space<vmem>>, %arg3: memref<6x128x8xf32, #tpu.memory_space<vmem>>, %arg4: memref<6x1x16xf32, #tpu.memory_space<vmem>>, %arg5: memref<6x1x8xf32, #tpu.memory_space<vmem>>, %arg6: memref<8x8xf32, #tpu.memory_space<vmem>>, %arg7: memref<6x432x128xf32, #tpu.memory_space<vmem>>, %arg8: memref<6x!tpu.dma_semaphore, #tpu.memory_space<semaphore_mem>>) attributes {dimension_semantics = [], scalar_prefetch = 0 : i64, scratch_operands = 2 : i64, tpu.core_type = #tpu.core_type<tc>} {
    %c0_i32 = arith.constant 0 : i32
    %c0_i32_0 = arith.constant 0 : i32
    %c0_i32_1 = arith.constant 0 : i32
    %c0_i32_2 = arith.constant 0 : i32
    %c0_i32_3 = arith.constant 0 : i32
    %0 = tpu.memref_slice %arg1[%c0_i32, %c0_i32_2, %c0_i32_3] : memref<6x432x128xf32, #tpu.memory_space<any>> -> memref<1x432x128xf32, #tpu.memory_space<any>>
    %1 = tpu.memref_squeeze %0 : memref<1x432x128xf32, #tpu.memory_space<any>> -> memref<432x128xf32, #tpu.memory_space<any>>
    %c0_i32_4 = arith.constant 0 : i32
    %c0_i32_5 = arith.constant 0 : i32
    %2 = tpu.memref_slice %arg7[%c0_i32_0, %c0_i32_4, %c0_i32_5] : memref<6x432x128xf32, #tpu.memory_space<vmem>> -> memref<1x432x128xf32, #tpu.memory_space<vmem>>
    %3 = tpu.memref_squeeze %2 : memref<1x432x128xf32, #tpu.memory_space<vmem>> -> memref<432x128xf32, #tpu.memory_space<vmem>>
    %4 = tpu.memref_slice %arg8[%c0_i32_1] : memref<6x!tpu.dma_semaphore, #tpu.memory_space<semaphore_mem>> -> memref<1x!tpu.dma_semaphore, #tpu.memory_space<semaphore_mem>>
    %5 = tpu.memref_squeeze %4 : memref<1x!tpu.dma_semaphore, #tpu.memory_space<semaphore_mem>> -> memref<!tpu.dma_semaphore, #tpu.memory_space<semaphore_mem>>
    tpu.enqueue_dma source(%1 : memref<432x128xf32, #tpu.memory_space<any>>) target(%3 : memref<432x128xf32, #tpu.memory_space<vmem>>) target_semaphore(%5 : memref<!tpu.dma_semaphore, #tpu.memory_space<semaphore_mem>>)
    %c1_i32 = arith.constant 1 : i32
    %c1_i32_6 = arith.constant 1 : i32
    %c1_i32_7 = arith.constant 1 : i32
    %c0_i32_8 = arith.constant 0 : i32
    %c0_i32_9 = arith.constant 0 : i32
    %6 = tpu.memref_slice %arg1[%c1_i32, %c0_i32_8, %c0_i32_9] : memref<6x432x128xf32, #tpu.memory_space<any>> -> memref<1x432x128xf32, #tpu.memory_space<any>>
    %7 = tpu.memref_squeeze %6 : memref<1x432x128xf32, #tpu.memory_space<any>> -> memref<432x128xf32, #tpu.memory_space<any>>
    %c0_i32_10 = arith.constant 0 : i32
    %c0_i32_11 = arith.constant 0 : i32
    %8 = tpu.memref_slice %arg7[%c1_i32_6, %c0_i32_10, %c0_i32_11] : memref<6x432x128xf32, #tpu.memory_space<vmem>> -> memref<1x432x128xf32, #tpu.memory_space<vmem>>
    %9 = tpu.memref_squeeze %8 : memref<1x432x128xf32, #tpu.memory_space<vmem>> -> memref<432x128xf32, #tpu.memory_space<vmem>>
    %10 = tpu.memref_slice %arg8[%c1_i32_7] : memref<6x!tpu.dma_semaphore, #tpu.memory_space<semaphore_mem>> -> memref<1x!tpu.dma_semaphore, #tpu.memory_space<semaphore_mem>>
    %11 = tpu.memref_squeeze %10 : memref<1x!tpu.dma_semaphore, #tpu.memory_space<semaphore_mem>> -> memref<!tpu.dma_semaphore, #tpu.memory_space<semaphore_mem>>
    tpu.enqueue_dma source(%7 : memref<432x128xf32, #tpu.memory_space<any>>) target(%9 : memref<432x128xf32, #tpu.memory_space<vmem>>) target_semaphore(%11 : memref<!tpu.dma_semaphore, #tpu.memory_space<semaphore_mem>>)
    %c2_i32 = arith.constant 2 : i32
    %c2_i32_12 = arith.constant 2 : i32
    %c2_i32_13 = arith.constant 2 : i32
    %c0_i32_14 = arith.constant 0 : i32
    %c0_i32_15 = arith.constant 0 : i32
    %12 = tpu.memref_slice %arg1[%c2_i32, %c0_i32_14, %c0_i32_15] : memref<6x432x128xf32, #tpu.memory_space<any>> -> memref<1x432x128xf32, #tpu.memory_space<any>>
    %13 = tpu.memref_squeeze %12 : memref<1x432x128xf32, #tpu.memory_space<any>> -> memref<432x128xf32, #tpu.memory_space<any>>
    %c0_i32_16 = arith.constant 0 : i32
    %c0_i32_17 = arith.constant 0 : i32
    %14 = tpu.memref_slice %arg7[%c2_i32_12, %c0_i32_16, %c0_i32_17] : memref<6x432x128xf32, #tpu.memory_space<vmem>> -> memref<1x432x128xf32, #tpu.memory_space<vmem>>
    %15 = tpu.memref_squeeze %14 : memref<1x432x128xf32, #tpu.memory_space<vmem>> -> memref<432x128xf32, #tpu.memory_space<vmem>>
    %16 = tpu.memref_slice %arg8[%c2_i32_13] : memref<6x!tpu.dma_semaphore, #tpu.memory_space<semaphore_mem>> -> memref<1x!tpu.dma_semaphore, #tpu.memory_space<semaphore_mem>>
    %17 = tpu.memref_squeeze %16 : memref<1x!tpu.dma_semaphore, #tpu.memory_space<semaphore_mem>> -> memref<!tpu.dma_semaphore, #tpu.memory_space<semaphore_mem>>
    tpu.enqueue_dma source(%13 : memref<432x128xf32, #tpu.memory_space<any>>) target(%15 : memref<432x128xf32, #tpu.memory_space<vmem>>) target_semaphore(%17 : memref<!tpu.dma_semaphore, #tpu.memory_space<semaphore_mem>>)
    %c3_i32 = arith.constant 3 : i32
    %c3_i32_18 = arith.constant 3 : i32
    %c3_i32_19 = arith.constant 3 : i32
    %c0_i32_20 = arith.constant 0 : i32
    %c0_i32_21 = arith.constant 0 : i32
    %18 = tpu.memref_slice %arg1[%c3_i32, %c0_i32_20, %c0_i32_21] : memref<6x432x128xf32, #tpu.memory_space<any>> -> memref<1x432x128xf32, #tpu.memory_space<any>>
    %19 = tpu.memref_squeeze %18 : memref<1x432x128xf32, #tpu.memory_space<any>> -> memref<432x128xf32, #tpu.memory_space<any>>
    %c0_i32_22 = arith.constant 0 : i32
    %c0_i32_23 = arith.constant 0 : i32
    %20 = tpu.memref_slice %arg7[%c3_i32_18, %c0_i32_22, %c0_i32_23] : memref<6x432x128xf32, #tpu.memory_space<vmem>> -> memref<1x432x128xf32, #tpu.memory_space<vmem>>
    %21 = tpu.memref_squeeze %20 : memref<1x432x128xf32, #tpu.memory_space<vmem>> -> memref<432x128xf32, #tpu.memory_space<vmem>>
    %22 = tpu.memref_slice %arg8[%c3_i32_19] : memref<6x!tpu.dma_semaphore, #tpu.memory_space<semaphore_mem>> -> memref<1x!tpu.dma_semaphore, #tpu.memory_space<semaphore_mem>>
    %23 = tpu.memref_squeeze %22 : memref<1x!tpu.dma_semaphore, #tpu.memory_space<semaphore_mem>> -> memref<!tpu.dma_semaphore, #tpu.memory_space<semaphore_mem>>
    tpu.enqueue_dma source(%19 : memref<432x128xf32, #tpu.memory_space<any>>) target(%21 : memref<432x128xf32, #tpu.memory_space<vmem>>) target_semaphore(%23 : memref<!tpu.dma_semaphore, #tpu.memory_space<semaphore_mem>>)
    %c4_i32 = arith.constant 4 : i32
    %c4_i32_24 = arith.constant 4 : i32
    %c4_i32_25 = arith.constant 4 : i32
    %c0_i32_26 = arith.constant 0 : i32
    %c0_i32_27 = arith.constant 0 : i32
    %24 = tpu.memref_slice %arg1[%c4_i32, %c0_i32_26, %c0_i32_27] : memref<6x432x128xf32, #tpu.memory_space<any>> -> memref<1x432x128xf32, #tpu.memory_space<any>>
    %25 = tpu.memref_squeeze %24 : memref<1x432x128xf32, #tpu.memory_space<any>> -> memref<432x128xf32, #tpu.memory_space<any>>
    %c0_i32_28 = arith.constant 0 : i32
    %c0_i32_29 = arith.constant 0 : i32
    %26 = tpu.memref_slice %arg7[%c4_i32_24, %c0_i32_28, %c0_i32_29] : memref<6x432x128xf32, #tpu.memory_space<vmem>> -> memref<1x432x128xf32, #tpu.memory_space<vmem>>
    %27 = tpu.memref_squeeze %26 : memref<1x432x128xf32, #tpu.memory_space<vmem>> -> memref<432x128xf32, #tpu.memory_space<vmem>>
    %28 = tpu.memref_slice %arg8[%c4_i32_25] : memref<6x!tpu.dma_semaphore, #tpu.memory_space<semaphore_mem>> -> memref<1x!tpu.dma_semaphore, #tpu.memory_space<semaphore_mem>>
    %29 = tpu.memref_squeeze %28 : memref<1x!tpu.dma_semaphore, #tpu.memory_space<semaphore_mem>> -> memref<!tpu.dma_semaphore, #tpu.memory_space<semaphore_mem>>
    tpu.enqueue_dma source(%25 : memref<432x128xf32, #tpu.memory_space<any>>) target(%27 : memref<432x128xf32, #tpu.memory_space<vmem>>) target_semaphore(%29 : memref<!tpu.dma_semaphore, #tpu.memory_space<semaphore_mem>>)
    %c5_i32 = arith.constant 5 : i32
    %c5_i32_30 = arith.constant 5 : i32
    %c5_i32_31 = arith.constant 5 : i32
    %c0_i32_32 = arith.constant 0 : i32
    %c0_i32_33 = arith.constant 0 : i32
    %30 = tpu.memref_slice %arg1[%c5_i32, %c0_i32_32, %c0_i32_33] : memref<6x432x128xf32, #tpu.memory_space<any>> -> memref<1x432x128xf32, #tpu.memory_space<any>>
    %31 = tpu.memref_squeeze %30 : memref<1x432x128xf32, #tpu.memory_space<any>> -> memref<432x128xf32, #tpu.memory_space<any>>
    %c0_i32_34 = arith.constant 0 : i32
    %c0_i32_35 = arith.constant 0 : i32
    %32 = tpu.memref_slice %arg7[%c5_i32_30, %c0_i32_34, %c0_i32_35] : memref<6x432x128xf32, #tpu.memory_space<vmem>> -> memref<1x432x128xf32, #tpu.memory_space<vmem>>
    %33 = tpu.memref_squeeze %32 : memref<1x432x128xf32, #tpu.memory_space<vmem>> -> memref<432x128xf32, #tpu.memory_space<vmem>>
    %34 = tpu.memref_slice %arg8[%c5_i32_31] : memref<6x!tpu.dma_semaphore, #tpu.memory_space<semaphore_mem>> -> memref<1x!tpu.dma_semaphore, #tpu.memory_space<semaphore_mem>>
    %35 = tpu.memref_squeeze %34 : memref<1x!tpu.dma_semaphore, #tpu.memory_space<semaphore_mem>> -> memref<!tpu.dma_semaphore, #tpu.memory_space<semaphore_mem>>
    tpu.enqueue_dma source(%31 : memref<432x128xf32, #tpu.memory_space<any>>) target(%33 : memref<432x128xf32, #tpu.memory_space<vmem>>) target_semaphore(%35 : memref<!tpu.dma_semaphore, #tpu.memory_space<semaphore_mem>>)
    %c0 = arith.constant 0 : index
    %c0_36 = arith.constant 0 : index
    %36 = vector.load %arg0[%c0, %c0_36] : memref<8x16xf32, #tpu.memory_space<vmem>>, vector<8x16xf32>
    %cst = arith.constant 0.000000e+00 : f32
    %37 = vector.broadcast %cst : f32 to vector<8x8xf32>
    %c0_i32_37 = arith.constant 0 : i32
    %c0_i32_38 = arith.constant 0 : i32
    %c0_i32_39 = arith.constant 0 : i32
    %c0_i32_40 = arith.constant 0 : i32
    %c0_i32_41 = arith.constant 0 : i32
    %38 = tpu.memref_slice %arg1[%c0_i32_37, %c0_i32_40, %c0_i32_41] : memref<6x432x128xf32, #tpu.memory_space<any>> -> memref<1x432x128xf32, #tpu.memory_space<any>>
    %39 = tpu.memref_squeeze %38 : memref<1x432x128xf32, #tpu.memory_space<any>> -> memref<432x128xf32, #tpu.memory_space<any>>
    %c0_i32_42 = arith.constant 0 : i32
    %c0_i32_43 = arith.constant 0 : i32
    %40 = tpu.memref_slice %arg7[%c0_i32_38, %c0_i32_42, %c0_i32_43] : memref<6x432x128xf32, #tpu.memory_space<vmem>> -> memref<1x432x128xf32, #tpu.memory_space<vmem>>
    %41 = tpu.memref_squeeze %40 : memref<1x432x128xf32, #tpu.memory_space<vmem>> -> memref<432x128xf32, #tpu.memory_space<vmem>>
    %42 = tpu.memref_slice %arg8[%c0_i32_39] : memref<6x!tpu.dma_semaphore, #tpu.memory_space<semaphore_mem>> -> memref<1x!tpu.dma_semaphore, #tpu.memory_space<semaphore_mem>>
    %43 = tpu.memref_squeeze %42 : memref<1x!tpu.dma_semaphore, #tpu.memory_space<semaphore_mem>> -> memref<!tpu.dma_semaphore, #tpu.memory_space<semaphore_mem>>
    tpu.wait_dma2 semaphore(%43 : memref<!tpu.dma_semaphore, #tpu.memory_space<semaphore_mem>>) src(%39 : memref<432x128xf32, #tpu.memory_space<any>>) dst(%41 : memref<432x128xf32, #tpu.memory_space<vmem>>)
    %c0_44 = arith.constant 0 : index
    %c0_45 = arith.constant 0 : index
    %c0_46 = arith.constant 0 : index
    %44 = vector.load %arg7[%c0_44, %c0_45, %c0_46] : memref<6x432x128xf32, #tpu.memory_space<vmem>>, vector<1x16x128xf32>
    %45 = vector.shape_cast %44 : vector<1x16x128xf32> to vector<16x128xf32>
    %c0_47 = arith.constant 0 : index
    %c16 = arith.constant 16 : index
    %c0_48 = arith.constant 0 : index
    %46 = vector.load %arg7[%c0_47, %c16, %c0_48] : memref<6x432x128xf32, #tpu.memory_space<vmem>>, vector<1x1x128xf32>
    %47 = vector.shape_cast %46 : vector<1x1x128xf32> to vector<1x128xf32>
    %cst_49 = arith.constant dense<0.000000e+00> : vector<8x128xf32>
    %48 = tpu.matmul %36, %45, %cst_49 {dimension_numbers = #tpu.dot_dimension_numbers<[1], [0], [0], [1], [0, 0, 1, 1], [], []>} : vector<8x16xf32>, vector<16x128xf32>, vector<8x128xf32> -> vector<8x128xf32>
    %49 = vector.broadcast %47 : vector<1x128xf32> to vector<8x128xf32>
    %50 = arith.addf %48, %49 : vector<8x128xf32>
    %cst_50 = arith.constant 0.000000e+00 : f32
    %51 = vector.broadcast %cst_50 : f32 to vector<8x128xf32>
    %52 = arith.maximumf %50, %51 : vector<8x128xf32>
    %c0_51 = arith.constant 0 : index
    %c24 = arith.constant 24 : index
    %c0_52 = arith.constant 0 : index
    %53 = vector.load %arg7[%c0_51, %c24, %c0_52] : memref<6x432x128xf32, #tpu.memory_space<vmem>>, vector<1x128x128xf32>
    %54 = vector.shape_cast %53 : vector<1x128x128xf32> to vector<128x128xf32>
    %c0_53 = arith.constant 0 : index
    %c152 = arith.constant 152 : index
    %c0_54 = arith.constant 0 : index
    %55 = vector.load %arg7[%c0_53, %c152, %c0_54] : memref<6x432x128xf32, #tpu.memory_space<vmem>>, vector<1x1x128xf32>
    %56 = vector.shape_cast %55 : vector<1x1x128xf32> to vector<1x128xf32>
    %cst_55 = arith.constant dense<0.000000e+00> : vector<8x128xf32>
    %57 = tpu.matmul %52, %54, %cst_55 {dimension_numbers = #tpu.dot_dimension_numbers<[1], [0], [0], [1], [0, 0, 1, 1], [], []>} : vector<8x128xf32>, vector<128x128xf32>, vector<8x128xf32> -> vector<8x128xf32>
    %58 = vector.broadcast %56 : vector<1x128xf32> to vector<8x128xf32>
    %59 = arith.addf %57, %58 : vector<8x128xf32>
    %cst_56 = arith.constant 0.000000e+00 : f32
    %60 = vector.broadcast %cst_56 : f32 to vector<8x128xf32>
    %61 = arith.maximumf %59, %60 : vector<8x128xf32>
    %c0_57 = arith.constant 0 : index
    %c160 = arith.constant 160 : index
    %c0_58 = arith.constant 0 : index
    %62 = vector.load %arg7[%c0_57, %c160, %c0_58] : memref<6x432x128xf32, #tpu.memory_space<vmem>>, vector<1x128x128xf32>
    %63 = vector.shape_cast %62 : vector<1x128x128xf32> to vector<128x128xf32>
    %c0_59 = arith.constant 0 : index
    %c288 = arith.constant 288 : index
    %c0_60 = arith.constant 0 : index
    %64 = vector.load %arg7[%c0_59, %c288, %c0_60] : memref<6x432x128xf32, #tpu.memory_space<vmem>>, vector<1x1x128xf32>
    %65 = vector.shape_cast %64 : vector<1x1x128xf32> to vector<1x128xf32>
    %cst_61 = arith.constant dense<0.000000e+00> : vector<8x128xf32>
    %66 = tpu.matmul %61, %63, %cst_61 {dimension_numbers = #tpu.dot_dimension_numbers<[1], [0], [0], [1], [0, 0, 1, 1], [], []>} : vector<8x128xf32>, vector<128x128xf32>, vector<8x128xf32> -> vector<8x128xf32>
    %67 = vector.broadcast %65 : vector<1x128xf32> to vector<8x128xf32>
    %68 = arith.addf %66, %67 : vector<8x128xf32>
    %cst_62 = arith.constant 0.000000e+00 : f32
    %69 = vector.broadcast %cst_62 : f32 to vector<8x128xf32>
    %70 = arith.maximumf %68, %69 : vector<8x128xf32>
    %c0_63 = arith.constant 0 : index
    %c296 = arith.constant 296 : index
    %c0_64 = arith.constant 0 : index
    %71 = vector.load %arg7[%c0_63, %c296, %c0_64] : memref<6x432x128xf32, #tpu.memory_space<vmem>>, vector<1x128x128xf32>
    %72 = vector.shape_cast %71 : vector<1x128x128xf32> to vector<128x128xf32>
    %c0_65 = arith.constant 0 : index
    %c424 = arith.constant 424 : index
    %c0_66 = arith.constant 0 : index
    %73 = vector.load %arg7[%c0_65, %c424, %c0_66] : memref<6x432x128xf32, #tpu.memory_space<vmem>>, vector<1x1x128xf32>
    %74 = vector.shape_cast %73 : vector<1x1x128xf32> to vector<1x128xf32>
    %cst_67 = arith.constant dense<0.000000e+00> : vector<8x128xf32>
    %75 = tpu.matmul %70, %72, %cst_67 {dimension_numbers = #tpu.dot_dimension_numbers<[1], [0], [0], [1], [0, 0, 1, 1], [], []>} : vector<8x128xf32>, vector<128x128xf32>, vector<8x128xf32> -> vector<8x128xf32>
    %76 = vector.broadcast %74 : vector<1x128xf32> to vector<8x128xf32>
    %77 = arith.addf %75, %76 : vector<8x128xf32>
    %cst_68 = arith.constant 0.000000e+00 : f32
    %78 = vector.broadcast %cst_68 : f32 to vector<8x128xf32>
    %79 = arith.maximumf %77, %78 : vector<8x128xf32>
    %c0_69 = arith.constant 0 : index
    %c0_70 = arith.constant 0 : index
    %c0_71 = arith.constant 0 : index
    %80 = vector.load %arg2[%c0_69, %c0_70, %c0_71] : memref<6x128x16xf32, #tpu.memory_space<vmem>>, vector<1x128x16xf32>
    %81 = vector.shape_cast %80 : vector<1x128x16xf32> to vector<128x16xf32>
    %cst_72 = arith.constant dense<0.000000e+00> : vector<8x16xf32>
    %82 = tpu.matmul %79, %81, %cst_72 {dimension_numbers = #tpu.dot_dimension_numbers<[1], [0], [0], [1], [0, 0, 1, 1], [], []>} : vector<8x128xf32>, vector<128x16xf32>, vector<8x16xf32> -> vector<8x16xf32>
    %c0_73 = arith.constant 0 : index
    %c0_74 = arith.constant 0 : index
    %c0_75 = arith.constant 0 : index
    %83 = vector.load %arg4[%c0_73, %c0_74, %c0_75] : memref<6x1x16xf32, #tpu.memory_space<vmem>>, vector<1x1x16xf32>
    %84 = vector.shape_cast %83 : vector<1x1x16xf32> to vector<1x16xf32>
    %85 = vector.broadcast %84 : vector<1x16xf32> to vector<8x16xf32>
    %86 = arith.addf %82, %85 : vector<8x16xf32>
    %c0_76 = arith.constant 0 : index
    %c0_77 = arith.constant 0 : index
    %c0_78 = arith.constant 0 : index
    %87 = vector.load %arg3[%c0_76, %c0_77, %c0_78] : memref<6x128x8xf32, #tpu.memory_space<vmem>>, vector<1x128x8xf32>
    %88 = vector.shape_cast %87 : vector<1x128x8xf32> to vector<128x8xf32>
    %cst_79 = arith.constant dense<0.000000e+00> : vector<8x8xf32>
    %89 = tpu.matmul %79, %88, %cst_79 {dimension_numbers = #tpu.dot_dimension_numbers<[1], [0], [0], [1], [0, 0, 1, 1], [], []>} : vector<8x128xf32>, vector<128x8xf32>, vector<8x8xf32> -> vector<8x8xf32>
    %c0_80 = arith.constant 0 : index
    %c0_81 = arith.constant 0 : index
    %c0_82 = arith.constant 0 : index
    %90 = vector.load %arg5[%c0_80, %c0_81, %c0_82] : memref<6x1x8xf32, #tpu.memory_space<vmem>>, vector<1x1x8xf32>
    %91 = vector.shape_cast %90 : vector<1x1x8xf32> to vector<1x8xf32>
    %92 = vector.broadcast %91 : vector<1x8xf32> to vector<8x8xf32>
    %93 = arith.addf %89, %92 : vector<8x8xf32>
    %94 = arith.subf %36, %86 : vector<8x16xf32>
    %95 = arith.addf %37, %93 : vector<8x8xf32>
    %c1_i32_83 = arith.constant 1 : i32
    %c1_i32_84 = arith.constant 1 : i32
    %c1_i32_85 = arith.constant 1 : i32
    %c0_i32_86 = arith.constant 0 : i32
    %c0_i32_87 = arith.constant 0 : i32
    %96 = tpu.memref_slice %arg1[%c1_i32_83, %c0_i32_86, %c0_i32_87] : memref<6x432x128xf32, #tpu.memory_space<any>> -> memref<1x432x128xf32, #tpu.memory_space<any>>
    %97 = tpu.memref_squeeze %96 : memref<1x432x128xf32, #tpu.memory_space<any>> -> memref<432x128xf32, #tpu.memory_space<any>>
    %c0_i32_88 = arith.constant 0 : i32
    %c0_i32_89 = arith.constant 0 : i32
    %98 = tpu.memref_slice %arg7[%c1_i32_84, %c0_i32_88, %c0_i32_89] : memref<6x432x128xf32, #tpu.memory_space<vmem>> -> memref<1x432x128xf32, #tpu.memory_space<vmem>>
    %99 = tpu.memref_squeeze %98 : memref<1x432x128xf32, #tpu.memory_space<vmem>> -> memref<432x128xf32, #tpu.memory_space<vmem>>
    %100 = tpu.memref_slice %arg8[%c1_i32_85] : memref<6x!tpu.dma_semaphore, #tpu.memory_space<semaphore_mem>> -> memref<1x!tpu.dma_semaphore, #tpu.memory_space<semaphore_mem>>
    %101 = tpu.memref_squeeze %100 : memref<1x!tpu.dma_semaphore, #tpu.memory_space<semaphore_mem>> -> memref<!tpu.dma_semaphore, #tpu.memory_space<semaphore_mem>>
    tpu.wait_dma2 semaphore(%101 : memref<!tpu.dma_semaphore, #tpu.memory_space<semaphore_mem>>) src(%97 : memref<432x128xf32, #tpu.memory_space<any>>) dst(%99 : memref<432x128xf32, #tpu.memory_space<vmem>>)
    %c1 = arith.constant 1 : index
    %c0_90 = arith.constant 0 : index
    %c0_91 = arith.constant 0 : index
    %102 = vector.load %arg7[%c1, %c0_90, %c0_91] : memref<6x432x128xf32, #tpu.memory_space<vmem>>, vector<1x16x128xf32>
    %103 = vector.shape_cast %102 : vector<1x16x128xf32> to vector<16x128xf32>
    %c1_92 = arith.constant 1 : index
    %c16_93 = arith.constant 16 : index
    %c0_94 = arith.constant 0 : index
    %104 = vector.load %arg7[%c1_92, %c16_93, %c0_94] : memref<6x432x128xf32, #tpu.memory_space<vmem>>, vector<1x1x128xf32>
    %105 = vector.shape_cast %104 : vector<1x1x128xf32> to vector<1x128xf32>
    %cst_95 = arith.constant dense<0.000000e+00> : vector<8x128xf32>
    %106 = tpu.matmul %94, %103, %cst_95 {dimension_numbers = #tpu.dot_dimension_numbers<[1], [0], [0], [1], [0, 0, 1, 1], [], []>} : vector<8x16xf32>, vector<16x128xf32>, vector<8x128xf32> -> vector<8x128xf32>
    %107 = vector.broadcast %105 : vector<1x128xf32> to vector<8x128xf32>
    %108 = arith.addf %106, %107 : vector<8x128xf32>
    %cst_96 = arith.constant 0.000000e+00 : f32
    %109 = vector.broadcast %cst_96 : f32 to vector<8x128xf32>
    %110 = arith.maximumf %108, %109 : vector<8x128xf32>
    %c1_97 = arith.constant 1 : index
    %c24_98 = arith.constant 24 : index
    %c0_99 = arith.constant 0 : index
    %111 = vector.load %arg7[%c1_97, %c24_98, %c0_99] : memref<6x432x128xf32, #tpu.memory_space<vmem>>, vector<1x128x128xf32>
    %112 = vector.shape_cast %111 : vector<1x128x128xf32> to vector<128x128xf32>
    %c1_100 = arith.constant 1 : index
    %c152_101 = arith.constant 152 : index
    %c0_102 = arith.constant 0 : index
    %113 = vector.load %arg7[%c1_100, %c152_101, %c0_102] : memref<6x432x128xf32, #tpu.memory_space<vmem>>, vector<1x1x128xf32>
    %114 = vector.shape_cast %113 : vector<1x1x128xf32> to vector<1x128xf32>
    %cst_103 = arith.constant dense<0.000000e+00> : vector<8x128xf32>
    %115 = tpu.matmul %110, %112, %cst_103 {dimension_numbers = #tpu.dot_dimension_numbers<[1], [0], [0], [1], [0, 0, 1, 1], [], []>} : vector<8x128xf32>, vector<128x128xf32>, vector<8x128xf32> -> vector<8x128xf32>
    %116 = vector.broadcast %114 : vector<1x128xf32> to vector<8x128xf32>
    %117 = arith.addf %115, %116 : vector<8x128xf32>
    %cst_104 = arith.constant 0.000000e+00 : f32
    %118 = vector.broadcast %cst_104 : f32 to vector<8x128xf32>
    %119 = arith.maximumf %117, %118 : vector<8x128xf32>
    %c1_105 = arith.constant 1 : index
    %c160_106 = arith.constant 160 : index
    %c0_107 = arith.constant 0 : index
    %120 = vector.load %arg7[%c1_105, %c160_106, %c0_107] : memref<6x432x128xf32, #tpu.memory_space<vmem>>, vector<1x128x128xf32>
    %121 = vector.shape_cast %120 : vector<1x128x128xf32> to vector<128x128xf32>
    %c1_108 = arith.constant 1 : index
    %c288_109 = arith.constant 288 : index
    %c0_110 = arith.constant 0 : index
    %122 = vector.load %arg7[%c1_108, %c288_109, %c0_110] : memref<6x432x128xf32, #tpu.memory_space<vmem>>, vector<1x1x128xf32>
    %123 = vector.shape_cast %122 : vector<1x1x128xf32> to vector<1x128xf32>
    %cst_111 = arith.constant dense<0.000000e+00> : vector<8x128xf32>
    %124 = tpu.matmul %119, %121, %cst_111 {dimension_numbers = #tpu.dot_dimension_numbers<[1], [0], [0], [1], [0, 0, 1, 1], [], []>} : vector<8x128xf32>, vector<128x128xf32>, vector<8x128xf32> -> vector<8x128xf32>
    %125 = vector.broadcast %123 : vector<1x128xf32> to vector<8x128xf32>
    %126 = arith.addf %124, %125 : vector<8x128xf32>
    %cst_112 = arith.constant 0.000000e+00 : f32
    %127 = vector.broadcast %cst_112 : f32 to vector<8x128xf32>
    %128 = arith.maximumf %126, %127 : vector<8x128xf32>
    %c1_113 = arith.constant 1 : index
    %c296_114 = arith.constant 296 : index
    %c0_115 = arith.constant 0 : index
    %129 = vector.load %arg7[%c1_113, %c296_114, %c0_115] : memref<6x432x128xf32, #tpu.memory_space<vmem>>, vector<1x128x128xf32>
    %130 = vector.shape_cast %129 : vector<1x128x128xf32> to vector<128x128xf32>
    %c1_116 = arith.constant 1 : index
    %c424_117 = arith.constant 424 : index
    %c0_118 = arith.constant 0 : index
    %131 = vector.load %arg7[%c1_116, %c424_117, %c0_118] : memref<6x432x128xf32, #tpu.memory_space<vmem>>, vector<1x1x128xf32>
    %132 = vector.shape_cast %131 : vector<1x1x128xf32> to vector<1x128xf32>
    %cst_119 = arith.constant dense<0.000000e+00> : vector<8x128xf32>
    %133 = tpu.matmul %128, %130, %cst_119 {dimension_numbers = #tpu.dot_dimension_numbers<[1], [0], [0], [1], [0, 0, 1, 1], [], []>} : vector<8x128xf32>, vector<128x128xf32>, vector<8x128xf32> -> vector<8x128xf32>
    %134 = vector.broadcast %132 : vector<1x128xf32> to vector<8x128xf32>
    %135 = arith.addf %133, %134 : vector<8x128xf32>
    %cst_120 = arith.constant 0.000000e+00 : f32
    %136 = vector.broadcast %cst_120 : f32 to vector<8x128xf32>
    %137 = arith.maximumf %135, %136 : vector<8x128xf32>
    %c1_121 = arith.constant 1 : index
    %c0_122 = arith.constant 0 : index
    %c0_123 = arith.constant 0 : index
    %138 = vector.load %arg2[%c1_121, %c0_122, %c0_123] : memref<6x128x16xf32, #tpu.memory_space<vmem>>, vector<1x128x16xf32>
    %139 = vector.shape_cast %138 : vector<1x128x16xf32> to vector<128x16xf32>
    %cst_124 = arith.constant dense<0.000000e+00> : vector<8x16xf32>
    %140 = tpu.matmul %137, %139, %cst_124 {dimension_numbers = #tpu.dot_dimension_numbers<[1], [0], [0], [1], [0, 0, 1, 1], [], []>} : vector<8x128xf32>, vector<128x16xf32>, vector<8x16xf32> -> vector<8x16xf32>
    %c1_125 = arith.constant 1 : index
    %c0_126 = arith.constant 0 : index
    %c0_127 = arith.constant 0 : index
    %141 = vector.load %arg4[%c1_125, %c0_126, %c0_127] : memref<6x1x16xf32, #tpu.memory_space<vmem>>, vector<1x1x16xf32>
    %142 = vector.shape_cast %141 : vector<1x1x16xf32> to vector<1x16xf32>
    %143 = vector.broadcast %142 : vector<1x16xf32> to vector<8x16xf32>
    %144 = arith.addf %140, %143 : vector<8x16xf32>
    %c1_128 = arith.constant 1 : index
    %c0_129 = arith.constant 0 : index
    %c0_130 = arith.constant 0 : index
    %145 = vector.load %arg3[%c1_128, %c0_129, %c0_130] : memref<6x128x8xf32, #tpu.memory_space<vmem>>, vector<1x128x8xf32>
    %146 = vector.shape_cast %145 : vector<1x128x8xf32> to vector<128x8xf32>
    %cst_131 = arith.constant dense<0.000000e+00> : vector<8x8xf32>
    %147 = tpu.matmul %137, %146, %cst_131 {dimension_numbers = #tpu.dot_dimension_numbers<[1], [0], [0], [1], [0, 0, 1, 1], [], []>} : vector<8x128xf32>, vector<128x8xf32>, vector<8x8xf32> -> vector<8x8xf32>
    %c1_132 = arith.constant 1 : index
    %c0_133 = arith.constant 0 : index
    %c0_134 = arith.constant 0 : index
    %148 = vector.load %arg5[%c1_132, %c0_133, %c0_134] : memref<6x1x8xf32, #tpu.memory_space<vmem>>, vector<1x1x8xf32>
    %149 = vector.shape_cast %148 : vector<1x1x8xf32> to vector<1x8xf32>
    %150 = vector.broadcast %149 : vector<1x8xf32> to vector<8x8xf32>
    %151 = arith.addf %147, %150 : vector<8x8xf32>
    %152 = arith.subf %94, %144 : vector<8x16xf32>
    %153 = arith.addf %95, %151 : vector<8x8xf32>
    %c2_i32_135 = arith.constant 2 : i32
    %c2_i32_136 = arith.constant 2 : i32
    %c2_i32_137 = arith.constant 2 : i32
    %c0_i32_138 = arith.constant 0 : i32
    %c0_i32_139 = arith.constant 0 : i32
    %154 = tpu.memref_slice %arg1[%c2_i32_135, %c0_i32_138, %c0_i32_139] : memref<6x432x128xf32, #tpu.memory_space<any>> -> memref<1x432x128xf32, #tpu.memory_space<any>>
    %155 = tpu.memref_squeeze %154 : memref<1x432x128xf32, #tpu.memory_space<any>> -> memref<432x128xf32, #tpu.memory_space<any>>
    %c0_i32_140 = arith.constant 0 : i32
    %c0_i32_141 = arith.constant 0 : i32
    %156 = tpu.memref_slice %arg7[%c2_i32_136, %c0_i32_140, %c0_i32_141] : memref<6x432x128xf32, #tpu.memory_space<vmem>> -> memref<1x432x128xf32, #tpu.memory_space<vmem>>
    %157 = tpu.memref_squeeze %156 : memref<1x432x128xf32, #tpu.memory_space<vmem>> -> memref<432x128xf32, #tpu.memory_space<vmem>>
    %158 = tpu.memref_slice %arg8[%c2_i32_137] : memref<6x!tpu.dma_semaphore, #tpu.memory_space<semaphore_mem>> -> memref<1x!tpu.dma_semaphore, #tpu.memory_space<semaphore_mem>>
    %159 = tpu.memref_squeeze %158 : memref<1x!tpu.dma_semaphore, #tpu.memory_space<semaphore_mem>> -> memref<!tpu.dma_semaphore, #tpu.memory_space<semaphore_mem>>
    tpu.wait_dma2 semaphore(%159 : memref<!tpu.dma_semaphore, #tpu.memory_space<semaphore_mem>>) src(%155 : memref<432x128xf32, #tpu.memory_space<any>>) dst(%157 : memref<432x128xf32, #tpu.memory_space<vmem>>)
    %c2 = arith.constant 2 : index
    %c0_142 = arith.constant 0 : index
    %c0_143 = arith.constant 0 : index
    %160 = vector.load %arg7[%c2, %c0_142, %c0_143] : memref<6x432x128xf32, #tpu.memory_space<vmem>>, vector<1x16x128xf32>
    %161 = vector.shape_cast %160 : vector<1x16x128xf32> to vector<16x128xf32>
    %c2_144 = arith.constant 2 : index
    %c16_145 = arith.constant 16 : index
    %c0_146 = arith.constant 0 : index
    %162 = vector.load %arg7[%c2_144, %c16_145, %c0_146] : memref<6x432x128xf32, #tpu.memory_space<vmem>>, vector<1x1x128xf32>
    %163 = vector.shape_cast %162 : vector<1x1x128xf32> to vector<1x128xf32>
    %cst_147 = arith.constant dense<0.000000e+00> : vector<8x128xf32>
    %164 = tpu.matmul %152, %161, %cst_147 {dimension_numbers = #tpu.dot_dimension_numbers<[1], [0], [0], [1], [0, 0, 1, 1], [], []>} : vector<8x16xf32>, vector<16x128xf32>, vector<8x128xf32> -> vector<8x128xf32>
    %165 = vector.broadcast %163 : vector<1x128xf32> to vector<8x128xf32>
    %166 = arith.addf %164, %165 : vector<8x128xf32>
    %cst_148 = arith.constant 0.000000e+00 : f32
    %167 = vector.broadcast %cst_148 : f32 to vector<8x128xf32>
    %168 = arith.maximumf %166, %167 : vector<8x128xf32>
    %c2_149 = arith.constant 2 : index
    %c24_150 = arith.constant 24 : index
    %c0_151 = arith.constant 0 : index
    %169 = vector.load %arg7[%c2_149, %c24_150, %c0_151] : memref<6x432x128xf32, #tpu.memory_space<vmem>>, vector<1x128x128xf32>
    %170 = vector.shape_cast %169 : vector<1x128x128xf32> to vector<128x128xf32>
    %c2_152 = arith.constant 2 : index
    %c152_153 = arith.constant 152 : index
    %c0_154 = arith.constant 0 : index
    %171 = vector.load %arg7[%c2_152, %c152_153, %c0_154] : memref<6x432x128xf32, #tpu.memory_space<vmem>>, vector<1x1x128xf32>
    %172 = vector.shape_cast %171 : vector<1x1x128xf32> to vector<1x128xf32>
    %cst_155 = arith.constant dense<0.000000e+00> : vector<8x128xf32>
    %173 = tpu.matmul %168, %170, %cst_155 {dimension_numbers = #tpu.dot_dimension_numbers<[1], [0], [0], [1], [0, 0, 1, 1], [], []>} : vector<8x128xf32>, vector<128x128xf32>, vector<8x128xf32> -> vector<8x128xf32>
    %174 = vector.broadcast %172 : vector<1x128xf32> to vector<8x128xf32>
    %175 = arith.addf %173, %174 : vector<8x128xf32>
    %cst_156 = arith.constant 0.000000e+00 : f32
    %176 = vector.broadcast %cst_156 : f32 to vector<8x128xf32>
    %177 = arith.maximumf %175, %176 : vector<8x128xf32>
    %c2_157 = arith.constant 2 : index
    %c160_158 = arith.constant 160 : index
    %c0_159 = arith.constant 0 : index
    %178 = vector.load %arg7[%c2_157, %c160_158, %c0_159] : memref<6x432x128xf32, #tpu.memory_space<vmem>>, vector<1x128x128xf32>
    %179 = vector.shape_cast %178 : vector<1x128x128xf32> to vector<128x128xf32>
    %c2_160 = arith.constant 2 : index
    %c288_161 = arith.constant 288 : index
    %c0_162 = arith.constant 0 : index
    %180 = vector.load %arg7[%c2_160, %c288_161, %c0_162] : memref<6x432x128xf32, #tpu.memory_space<vmem>>, vector<1x1x128xf32>
    %181 = vector.shape_cast %180 : vector<1x1x128xf32> to vector<1x128xf32>
    %cst_163 = arith.constant dense<0.000000e+00> : vector<8x128xf32>
    %182 = tpu.matmul %177, %179, %cst_163 {dimension_numbers = #tpu.dot_dimension_numbers<[1], [0], [0], [1], [0, 0, 1, 1], [], []>} : vector<8x128xf32>, vector<128x128xf32>, vector<8x128xf32> -> vector<8x128xf32>
    %183 = vector.broadcast %181 : vector<1x128xf32> to vector<8x128xf32>
    %184 = arith.addf %182, %183 : vector<8x128xf32>
    %cst_164 = arith.constant 0.000000e+00 : f32
    %185 = vector.broadcast %cst_164 : f32 to vector<8x128xf32>
    %186 = arith.maximumf %184, %185 : vector<8x128xf32>
    %c2_165 = arith.constant 2 : index
    %c296_166 = arith.constant 296 : index
    %c0_167 = arith.constant 0 : index
    %187 = vector.load %arg7[%c2_165, %c296_166, %c0_167] : memref<6x432x128xf32, #tpu.memory_space<vmem>>, vector<1x128x128xf32>
    %188 = vector.shape_cast %187 : vector<1x128x128xf32> to vector<128x128xf32>
    %c2_168 = arith.constant 2 : index
    %c424_169 = arith.constant 424 : index
    %c0_170 = arith.constant 0 : index
    %189 = vector.load %arg7[%c2_168, %c424_169, %c0_170] : memref<6x432x128xf32, #tpu.memory_space<vmem>>, vector<1x1x128xf32>
    %190 = vector.shape_cast %189 : vector<1x1x128xf32> to vector<1x128xf32>
    %cst_171 = arith.constant dense<0.000000e+00> : vector<8x128xf32>
    %191 = tpu.matmul %186, %188, %cst_171 {dimension_numbers = #tpu.dot_dimension_numbers<[1], [0], [0], [1], [0, 0, 1, 1], [], []>} : vector<8x128xf32>, vector<128x128xf32>, vector<8x128xf32> -> vector<8x128xf32>
    %192 = vector.broadcast %190 : vector<1x128xf32> to vector<8x128xf32>
    %193 = arith.addf %191, %192 : vector<8x128xf32>
    %cst_172 = arith.constant 0.000000e+00 : f32
    %194 = vector.broadcast %cst_172 : f32 to vector<8x128xf32>
    %195 = arith.maximumf %193, %194 : vector<8x128xf32>
    %c2_173 = arith.constant 2 : index
    %c0_174 = arith.constant 0 : index
    %c0_175 = arith.constant 0 : index
    %196 = vector.load %arg2[%c2_173, %c0_174, %c0_175] : memref<6x128x16xf32, #tpu.memory_space<vmem>>, vector<1x128x16xf32>
    %197 = vector.shape_cast %196 : vector<1x128x16xf32> to vector<128x16xf32>
    %cst_176 = arith.constant dense<0.000000e+00> : vector<8x16xf32>
    %198 = tpu.matmul %195, %197, %cst_176 {dimension_numbers = #tpu.dot_dimension_numbers<[1], [0], [0], [1], [0, 0, 1, 1], [], []>} : vector<8x128xf32>, vector<128x16xf32>, vector<8x16xf32> -> vector<8x16xf32>
    %c2_177 = arith.constant 2 : index
    %c0_178 = arith.constant 0 : index
    %c0_179 = arith.constant 0 : index
    %199 = vector.load %arg4[%c2_177, %c0_178, %c0_179] : memref<6x1x16xf32, #tpu.memory_space<vmem>>, vector<1x1x16xf32>
    %200 = vector.shape_cast %199 : vector<1x1x16xf32> to vector<1x16xf32>
    %201 = vector.broadcast %200 : vector<1x16xf32> to vector<8x16xf32>
    %202 = arith.addf %198, %201 : vector<8x16xf32>
    %c2_180 = arith.constant 2 : index
    %c0_181 = arith.constant 0 : index
    %c0_182 = arith.constant 0 : index
    %203 = vector.load %arg3[%c2_180, %c0_181, %c0_182] : memref<6x128x8xf32, #tpu.memory_space<vmem>>, vector<1x128x8xf32>
    %204 = vector.shape_cast %203 : vector<1x128x8xf32> to vector<128x8xf32>
    %cst_183 = arith.constant dense<0.000000e+00> : vector<8x8xf32>
    %205 = tpu.matmul %195, %204, %cst_183 {dimension_numbers = #tpu.dot_dimension_numbers<[1], [0], [0], [1], [0, 0, 1, 1], [], []>} : vector<8x128xf32>, vector<128x8xf32>, vector<8x8xf32> -> vector<8x8xf32>
    %c2_184 = arith.constant 2 : index
    %c0_185 = arith.constant 0 : index
    %c0_186 = arith.constant 0 : index
    %206 = vector.load %arg5[%c2_184, %c0_185, %c0_186] : memref<6x1x8xf32, #tpu.memory_space<vmem>>, vector<1x1x8xf32>
    %207 = vector.shape_cast %206 : vector<1x1x8xf32> to vector<1x8xf32>
    %208 = vector.broadcast %207 : vector<1x8xf32> to vector<8x8xf32>
    %209 = arith.addf %205, %208 : vector<8x8xf32>
    %210 = arith.subf %152, %202 : vector<8x16xf32>
    %211 = arith.addf %153, %209 : vector<8x8xf32>
    %c3_i32_187 = arith.constant 3 : i32
    %c3_i32_188 = arith.constant 3 : i32
    %c3_i32_189 = arith.constant 3 : i32
    %c0_i32_190 = arith.constant 0 : i32
    %c0_i32_191 = arith.constant 0 : i32
    %212 = tpu.memref_slice %arg1[%c3_i32_187, %c0_i32_190, %c0_i32_191] : memref<6x432x128xf32, #tpu.memory_space<any>> -> memref<1x432x128xf32, #tpu.memory_space<any>>
    %213 = tpu.memref_squeeze %212 : memref<1x432x128xf32, #tpu.memory_space<any>> -> memref<432x128xf32, #tpu.memory_space<any>>
    %c0_i32_192 = arith.constant 0 : i32
    %c0_i32_193 = arith.constant 0 : i32
    %214 = tpu.memref_slice %arg7[%c3_i32_188, %c0_i32_192, %c0_i32_193] : memref<6x432x128xf32, #tpu.memory_space<vmem>> -> memref<1x432x128xf32, #tpu.memory_space<vmem>>
    %215 = tpu.memref_squeeze %214 : memref<1x432x128xf32, #tpu.memory_space<vmem>> -> memref<432x128xf32, #tpu.memory_space<vmem>>
    %216 = tpu.memref_slice %arg8[%c3_i32_189] : memref<6x!tpu.dma_semaphore, #tpu.memory_space<semaphore_mem>> -> memref<1x!tpu.dma_semaphore, #tpu.memory_space<semaphore_mem>>
    %217 = tpu.memref_squeeze %216 : memref<1x!tpu.dma_semaphore, #tpu.memory_space<semaphore_mem>> -> memref<!tpu.dma_semaphore, #tpu.memory_space<semaphore_mem>>
    tpu.wait_dma2 semaphore(%217 : memref<!tpu.dma_semaphore, #tpu.memory_space<semaphore_mem>>) src(%213 : memref<432x128xf32, #tpu.memory_space<any>>) dst(%215 : memref<432x128xf32, #tpu.memory_space<vmem>>)
    %c3 = arith.constant 3 : index
    %c0_194 = arith.constant 0 : index
    %c0_195 = arith.constant 0 : index
    %218 = vector.load %arg7[%c3, %c0_194, %c0_195] : memref<6x432x128xf32, #tpu.memory_space<vmem>>, vector<1x16x128xf32>
    %219 = vector.shape_cast %218 : vector<1x16x128xf32> to vector<16x128xf32>
    %c3_196 = arith.constant 3 : index
    %c16_197 = arith.constant 16 : index
    %c0_198 = arith.constant 0 : index
    %220 = vector.load %arg7[%c3_196, %c16_197, %c0_198] : memref<6x432x128xf32, #tpu.memory_space<vmem>>, vector<1x1x128xf32>
    %221 = vector.shape_cast %220 : vector<1x1x128xf32> to vector<1x128xf32>
    %cst_199 = arith.constant dense<0.000000e+00> : vector<8x128xf32>
    %222 = tpu.matmul %210, %219, %cst_199 {dimension_numbers = #tpu.dot_dimension_numbers<[1], [0], [0], [1], [0, 0, 1, 1], [], []>} : vector<8x16xf32>, vector<16x128xf32>, vector<8x128xf32> -> vector<8x128xf32>
    %223 = vector.broadcast %221 : vector<1x128xf32> to vector<8x128xf32>
    %224 = arith.addf %222, %223 : vector<8x128xf32>
    %cst_200 = arith.constant 0.000000e+00 : f32
    %225 = vector.broadcast %cst_200 : f32 to vector<8x128xf32>
    %226 = arith.maximumf %224, %225 : vector<8x128xf32>
    %c3_201 = arith.constant 3 : index
    %c24_202 = arith.constant 24 : index
    %c0_203 = arith.constant 0 : index
    %227 = vector.load %arg7[%c3_201, %c24_202, %c0_203] : memref<6x432x128xf32, #tpu.memory_space<vmem>>, vector<1x128x128xf32>
    %228 = vector.shape_cast %227 : vector<1x128x128xf32> to vector<128x128xf32>
    %c3_204 = arith.constant 3 : index
    %c152_205 = arith.constant 152 : index
    %c0_206 = arith.constant 0 : index
    %229 = vector.load %arg7[%c3_204, %c152_205, %c0_206] : memref<6x432x128xf32, #tpu.memory_space<vmem>>, vector<1x1x128xf32>
    %230 = vector.shape_cast %229 : vector<1x1x128xf32> to vector<1x128xf32>
    %cst_207 = arith.constant dense<0.000000e+00> : vector<8x128xf32>
    %231 = tpu.matmul %226, %228, %cst_207 {dimension_numbers = #tpu.dot_dimension_numbers<[1], [0], [0], [1], [0, 0, 1, 1], [], []>} : vector<8x128xf32>, vector<128x128xf32>, vector<8x128xf32> -> vector<8x128xf32>
    %232 = vector.broadcast %230 : vector<1x128xf32> to vector<8x128xf32>
    %233 = arith.addf %231, %232 : vector<8x128xf32>
    %cst_208 = arith.constant 0.000000e+00 : f32
    %234 = vector.broadcast %cst_208 : f32 to vector<8x128xf32>
    %235 = arith.maximumf %233, %234 : vector<8x128xf32>
    %c3_209 = arith.constant 3 : index
    %c160_210 = arith.constant 160 : index
    %c0_211 = arith.constant 0 : index
    %236 = vector.load %arg7[%c3_209, %c160_210, %c0_211] : memref<6x432x128xf32, #tpu.memory_space<vmem>>, vector<1x128x128xf32>
    %237 = vector.shape_cast %236 : vector<1x128x128xf32> to vector<128x128xf32>
    %c3_212 = arith.constant 3 : index
    %c288_213 = arith.constant 288 : index
    %c0_214 = arith.constant 0 : index
    %238 = vector.load %arg7[%c3_212, %c288_213, %c0_214] : memref<6x432x128xf32, #tpu.memory_space<vmem>>, vector<1x1x128xf32>
    %239 = vector.shape_cast %238 : vector<1x1x128xf32> to vector<1x128xf32>
    %cst_215 = arith.constant dense<0.000000e+00> : vector<8x128xf32>
    %240 = tpu.matmul %235, %237, %cst_215 {dimension_numbers = #tpu.dot_dimension_numbers<[1], [0], [0], [1], [0, 0, 1, 1], [], []>} : vector<8x128xf32>, vector<128x128xf32>, vector<8x128xf32> -> vector<8x128xf32>
    %241 = vector.broadcast %239 : vector<1x128xf32> to vector<8x128xf32>
    %242 = arith.addf %240, %241 : vector<8x128xf32>
    %cst_216 = arith.constant 0.000000e+00 : f32
    %243 = vector.broadcast %cst_216 : f32 to vector<8x128xf32>
    %244 = arith.maximumf %242, %243 : vector<8x128xf32>
    %c3_217 = arith.constant 3 : index
    %c296_218 = arith.constant 296 : index
    %c0_219 = arith.constant 0 : index
    %245 = vector.load %arg7[%c3_217, %c296_218, %c0_219] : memref<6x432x128xf32, #tpu.memory_space<vmem>>, vector<1x128x128xf32>
    %246 = vector.shape_cast %245 : vector<1x128x128xf32> to vector<128x128xf32>
    %c3_220 = arith.constant 3 : index
    %c424_221 = arith.constant 424 : index
    %c0_222 = arith.constant 0 : index
    %247 = vector.load %arg7[%c3_220, %c424_221, %c0_222] : memref<6x432x128xf32, #tpu.memory_space<vmem>>, vector<1x1x128xf32>
    %248 = vector.shape_cast %247 : vector<1x1x128xf32> to vector<1x128xf32>
    %cst_223 = arith.constant dense<0.000000e+00> : vector<8x128xf32>
    %249 = tpu.matmul %244, %246, %cst_223 {dimension_numbers = #tpu.dot_dimension_numbers<[1], [0], [0], [1], [0, 0, 1, 1], [], []>} : vector<8x128xf32>, vector<128x128xf32>, vector<8x128xf32> -> vector<8x128xf32>
    %250 = vector.broadcast %248 : vector<1x128xf32> to vector<8x128xf32>
    %251 = arith.addf %249, %250 : vector<8x128xf32>
    %cst_224 = arith.constant 0.000000e+00 : f32
    %252 = vector.broadcast %cst_224 : f32 to vector<8x128xf32>
    %253 = arith.maximumf %251, %252 : vector<8x128xf32>
    %c3_225 = arith.constant 3 : index
    %c0_226 = arith.constant 0 : index
    %c0_227 = arith.constant 0 : index
    %254 = vector.load %arg2[%c3_225, %c0_226, %c0_227] : memref<6x128x16xf32, #tpu.memory_space<vmem>>, vector<1x128x16xf32>
    %255 = vector.shape_cast %254 : vector<1x128x16xf32> to vector<128x16xf32>
    %cst_228 = arith.constant dense<0.000000e+00> : vector<8x16xf32>
    %256 = tpu.matmul %253, %255, %cst_228 {dimension_numbers = #tpu.dot_dimension_numbers<[1], [0], [0], [1], [0, 0, 1, 1], [], []>} : vector<8x128xf32>, vector<128x16xf32>, vector<8x16xf32> -> vector<8x16xf32>
    %c3_229 = arith.constant 3 : index
    %c0_230 = arith.constant 0 : index
    %c0_231 = arith.constant 0 : index
    %257 = vector.load %arg4[%c3_229, %c0_230, %c0_231] : memref<6x1x16xf32, #tpu.memory_space<vmem>>, vector<1x1x16xf32>
    %258 = vector.shape_cast %257 : vector<1x1x16xf32> to vector<1x16xf32>
    %259 = vector.broadcast %258 : vector<1x16xf32> to vector<8x16xf32>
    %260 = arith.addf %256, %259 : vector<8x16xf32>
    %c3_232 = arith.constant 3 : index
    %c0_233 = arith.constant 0 : index
    %c0_234 = arith.constant 0 : index
    %261 = vector.load %arg3[%c3_232, %c0_233, %c0_234] : memref<6x128x8xf32, #tpu.memory_space<vmem>>, vector<1x128x8xf32>
    %262 = vector.shape_cast %261 : vector<1x128x8xf32> to vector<128x8xf32>
    %cst_235 = arith.constant dense<0.000000e+00> : vector<8x8xf32>
    %263 = tpu.matmul %253, %262, %cst_235 {dimension_numbers = #tpu.dot_dimension_numbers<[1], [0], [0], [1], [0, 0, 1, 1], [], []>} : vector<8x128xf32>, vector<128x8xf32>, vector<8x8xf32> -> vector<8x8xf32>
    %c3_236 = arith.constant 3 : index
    %c0_237 = arith.constant 0 : index
    %c0_238 = arith.constant 0 : index
    %264 = vector.load %arg5[%c3_236, %c0_237, %c0_238] : memref<6x1x8xf32, #tpu.memory_space<vmem>>, vector<1x1x8xf32>
    %265 = vector.shape_cast %264 : vector<1x1x8xf32> to vector<1x8xf32>
    %266 = vector.broadcast %265 : vector<1x8xf32> to vector<8x8xf32>
    %267 = arith.addf %263, %266 : vector<8x8xf32>
    %268 = arith.subf %210, %260 : vector<8x16xf32>
    %269 = arith.addf %211, %267 : vector<8x8xf32>
    %c4_i32_239 = arith.constant 4 : i32
    %c4_i32_240 = arith.constant 4 : i32
    %c4_i32_241 = arith.constant 4 : i32
    %c0_i32_242 = arith.constant 0 : i32
    %c0_i32_243 = arith.constant 0 : i32
    %270 = tpu.memref_slice %arg1[%c4_i32_239, %c0_i32_242, %c0_i32_243] : memref<6x432x128xf32, #tpu.memory_space<any>> -> memref<1x432x128xf32, #tpu.memory_space<any>>
    %271 = tpu.memref_squeeze %270 : memref<1x432x128xf32, #tpu.memory_space<any>> -> memref<432x128xf32, #tpu.memory_space<any>>
    %c0_i32_244 = arith.constant 0 : i32
    %c0_i32_245 = arith.constant 0 : i32
    %272 = tpu.memref_slice %arg7[%c4_i32_240, %c0_i32_244, %c0_i32_245] : memref<6x432x128xf32, #tpu.memory_space<vmem>> -> memref<1x432x128xf32, #tpu.memory_space<vmem>>
    %273 = tpu.memref_squeeze %272 : memref<1x432x128xf32, #tpu.memory_space<vmem>> -> memref<432x128xf32, #tpu.memory_space<vmem>>
    %274 = tpu.memref_slice %arg8[%c4_i32_241] : memref<6x!tpu.dma_semaphore, #tpu.memory_space<semaphore_mem>> -> memref<1x!tpu.dma_semaphore, #tpu.memory_space<semaphore_mem>>
    %275 = tpu.memref_squeeze %274 : memref<1x!tpu.dma_semaphore, #tpu.memory_space<semaphore_mem>> -> memref<!tpu.dma_semaphore, #tpu.memory_space<semaphore_mem>>
    tpu.wait_dma2 semaphore(%275 : memref<!tpu.dma_semaphore, #tpu.memory_space<semaphore_mem>>) src(%271 : memref<432x128xf32, #tpu.memory_space<any>>) dst(%273 : memref<432x128xf32, #tpu.memory_space<vmem>>)
    %c4 = arith.constant 4 : index
    %c0_246 = arith.constant 0 : index
    %c0_247 = arith.constant 0 : index
    %276 = vector.load %arg7[%c4, %c0_246, %c0_247] : memref<6x432x128xf32, #tpu.memory_space<vmem>>, vector<1x16x128xf32>
    %277 = vector.shape_cast %276 : vector<1x16x128xf32> to vector<16x128xf32>
    %c4_248 = arith.constant 4 : index
    %c16_249 = arith.constant 16 : index
    %c0_250 = arith.constant 0 : index
    %278 = vector.load %arg7[%c4_248, %c16_249, %c0_250] : memref<6x432x128xf32, #tpu.memory_space<vmem>>, vector<1x1x128xf32>
    %279 = vector.shape_cast %278 : vector<1x1x128xf32> to vector<1x128xf32>
    %cst_251 = arith.constant dense<0.000000e+00> : vector<8x128xf32>
    %280 = tpu.matmul %268, %277, %cst_251 {dimension_numbers = #tpu.dot_dimension_numbers<[1], [0], [0], [1], [0, 0, 1, 1], [], []>} : vector<8x16xf32>, vector<16x128xf32>, vector<8x128xf32> -> vector<8x128xf32>
    %281 = vector.broadcast %279 : vector<1x128xf32> to vector<8x128xf32>
    %282 = arith.addf %280, %281 : vector<8x128xf32>
    %cst_252 = arith.constant 0.000000e+00 : f32
    %283 = vector.broadcast %cst_252 : f32 to vector<8x128xf32>
    %284 = arith.maximumf %282, %283 : vector<8x128xf32>
    %c4_253 = arith.constant 4 : index
    %c24_254 = arith.constant 24 : index
    %c0_255 = arith.constant 0 : index
    %285 = vector.load %arg7[%c4_253, %c24_254, %c0_255] : memref<6x432x128xf32, #tpu.memory_space<vmem>>, vector<1x128x128xf32>
    %286 = vector.shape_cast %285 : vector<1x128x128xf32> to vector<128x128xf32>
    %c4_256 = arith.constant 4 : index
    %c152_257 = arith.constant 152 : index
    %c0_258 = arith.constant 0 : index
    %287 = vector.load %arg7[%c4_256, %c152_257, %c0_258] : memref<6x432x128xf32, #tpu.memory_space<vmem>>, vector<1x1x128xf32>
    %288 = vector.shape_cast %287 : vector<1x1x128xf32> to vector<1x128xf32>
    %cst_259 = arith.constant dense<0.000000e+00> : vector<8x128xf32>
    %289 = tpu.matmul %284, %286, %cst_259 {dimension_numbers = #tpu.dot_dimension_numbers<[1], [0], [0], [1], [0, 0, 1, 1], [], []>} : vector<8x128xf32>, vector<128x128xf32>, vector<8x128xf32> -> vector<8x128xf32>
    %290 = vector.broadcast %288 : vector<1x128xf32> to vector<8x128xf32>
    %291 = arith.addf %289, %290 : vector<8x128xf32>
    %cst_260 = arith.constant 0.000000e+00 : f32
    %292 = vector.broadcast %cst_260 : f32 to vector<8x128xf32>
    %293 = arith.maximumf %291, %292 : vector<8x128xf32>
    %c4_261 = arith.constant 4 : index
    %c160_262 = arith.constant 160 : index
    %c0_263 = arith.constant 0 : index
    %294 = vector.load %arg7[%c4_261, %c160_262, %c0_263] : memref<6x432x128xf32, #tpu.memory_space<vmem>>, vector<1x128x128xf32>
    %295 = vector.shape_cast %294 : vector<1x128x128xf32> to vector<128x128xf32>
    %c4_264 = arith.constant 4 : index
    %c288_265 = arith.constant 288 : index
    %c0_266 = arith.constant 0 : index
    %296 = vector.load %arg7[%c4_264, %c288_265, %c0_266] : memref<6x432x128xf32, #tpu.memory_space<vmem>>, vector<1x1x128xf32>
    %297 = vector.shape_cast %296 : vector<1x1x128xf32> to vector<1x128xf32>
    %cst_267 = arith.constant dense<0.000000e+00> : vector<8x128xf32>
    %298 = tpu.matmul %293, %295, %cst_267 {dimension_numbers = #tpu.dot_dimension_numbers<[1], [0], [0], [1], [0, 0, 1, 1], [], []>} : vector<8x128xf32>, vector<128x128xf32>, vector<8x128xf32> -> vector<8x128xf32>
    %299 = vector.broadcast %297 : vector<1x128xf32> to vector<8x128xf32>
    %300 = arith.addf %298, %299 : vector<8x128xf32>
    %cst_268 = arith.constant 0.000000e+00 : f32
    %301 = vector.broadcast %cst_268 : f32 to vector<8x128xf32>
    %302 = arith.maximumf %300, %301 : vector<8x128xf32>
    %c4_269 = arith.constant 4 : index
    %c296_270 = arith.constant 296 : index
    %c0_271 = arith.constant 0 : index
    %303 = vector.load %arg7[%c4_269, %c296_270, %c0_271] : memref<6x432x128xf32, #tpu.memory_space<vmem>>, vector<1x128x128xf32>
    %304 = vector.shape_cast %303 : vector<1x128x128xf32> to vector<128x128xf32>
    %c4_272 = arith.constant 4 : index
    %c424_273 = arith.constant 424 : index
    %c0_274 = arith.constant 0 : index
    %305 = vector.load %arg7[%c4_272, %c424_273, %c0_274] : memref<6x432x128xf32, #tpu.memory_space<vmem>>, vector<1x1x128xf32>
    %306 = vector.shape_cast %305 : vector<1x1x128xf32> to vector<1x128xf32>
    %cst_275 = arith.constant dense<0.000000e+00> : vector<8x128xf32>
    %307 = tpu.matmul %302, %304, %cst_275 {dimension_numbers = #tpu.dot_dimension_numbers<[1], [0], [0], [1], [0, 0, 1, 1], [], []>} : vector<8x128xf32>, vector<128x128xf32>, vector<8x128xf32> -> vector<8x128xf32>
    %308 = vector.broadcast %306 : vector<1x128xf32> to vector<8x128xf32>
    %309 = arith.addf %307, %308 : vector<8x128xf32>
    %cst_276 = arith.constant 0.000000e+00 : f32
    %310 = vector.broadcast %cst_276 : f32 to vector<8x128xf32>
    %311 = arith.maximumf %309, %310 : vector<8x128xf32>
    %c4_277 = arith.constant 4 : index
    %c0_278 = arith.constant 0 : index
    %c0_279 = arith.constant 0 : index
    %312 = vector.load %arg2[%c4_277, %c0_278, %c0_279] : memref<6x128x16xf32, #tpu.memory_space<vmem>>, vector<1x128x16xf32>
    %313 = vector.shape_cast %312 : vector<1x128x16xf32> to vector<128x16xf32>
    %cst_280 = arith.constant dense<0.000000e+00> : vector<8x16xf32>
    %314 = tpu.matmul %311, %313, %cst_280 {dimension_numbers = #tpu.dot_dimension_numbers<[1], [0], [0], [1], [0, 0, 1, 1], [], []>} : vector<8x128xf32>, vector<128x16xf32>, vector<8x16xf32> -> vector<8x16xf32>
    %c4_281 = arith.constant 4 : index
    %c0_282 = arith.constant 0 : index
    %c0_283 = arith.constant 0 : index
    %315 = vector.load %arg4[%c4_281, %c0_282, %c0_283] : memref<6x1x16xf32, #tpu.memory_space<vmem>>, vector<1x1x16xf32>
    %316 = vector.shape_cast %315 : vector<1x1x16xf32> to vector<1x16xf32>
    %317 = vector.broadcast %316 : vector<1x16xf32> to vector<8x16xf32>
    %318 = arith.addf %314, %317 : vector<8x16xf32>
    %c4_284 = arith.constant 4 : index
    %c0_285 = arith.constant 0 : index
    %c0_286 = arith.constant 0 : index
    %319 = vector.load %arg3[%c4_284, %c0_285, %c0_286] : memref<6x128x8xf32, #tpu.memory_space<vmem>>, vector<1x128x8xf32>
    %320 = vector.shape_cast %319 : vector<1x128x8xf32> to vector<128x8xf32>
    %cst_287 = arith.constant dense<0.000000e+00> : vector<8x8xf32>
    %321 = tpu.matmul %311, %320, %cst_287 {dimension_numbers = #tpu.dot_dimension_numbers<[1], [0], [0], [1], [0, 0, 1, 1], [], []>} : vector<8x128xf32>, vector<128x8xf32>, vector<8x8xf32> -> vector<8x8xf32>
    %c4_288 = arith.constant 4 : index
    %c0_289 = arith.constant 0 : index
    %c0_290 = arith.constant 0 : index
    %322 = vector.load %arg5[%c4_288, %c0_289, %c0_290] : memref<6x1x8xf32, #tpu.memory_space<vmem>>, vector<1x1x8xf32>
    %323 = vector.shape_cast %322 : vector<1x1x8xf32> to vector<1x8xf32>
    %324 = vector.broadcast %323 : vector<1x8xf32> to vector<8x8xf32>
    %325 = arith.addf %321, %324 : vector<8x8xf32>
    %326 = arith.subf %268, %318 : vector<8x16xf32>
    %327 = arith.addf %269, %325 : vector<8x8xf32>
    %c5_i32_291 = arith.constant 5 : i32
    %c5_i32_292 = arith.constant 5 : i32
    %c5_i32_293 = arith.constant 5 : i32
    %c0_i32_294 = arith.constant 0 : i32
    %c0_i32_295 = arith.constant 0 : i32
    %328 = tpu.memref_slice %arg1[%c5_i32_291, %c0_i32_294, %c0_i32_295] : memref<6x432x128xf32, #tpu.memory_space<any>> -> memref<1x432x128xf32, #tpu.memory_space<any>>
    %329 = tpu.memref_squeeze %328 : memref<1x432x128xf32, #tpu.memory_space<any>> -> memref<432x128xf32, #tpu.memory_space<any>>
    %c0_i32_296 = arith.constant 0 : i32
    %c0_i32_297 = arith.constant 0 : i32
    %330 = tpu.memref_slice %arg7[%c5_i32_292, %c0_i32_296, %c0_i32_297] : memref<6x432x128xf32, #tpu.memory_space<vmem>> -> memref<1x432x128xf32, #tpu.memory_space<vmem>>
    %331 = tpu.memref_squeeze %330 : memref<1x432x128xf32, #tpu.memory_space<vmem>> -> memref<432x128xf32, #tpu.memory_space<vmem>>
    %332 = tpu.memref_slice %arg8[%c5_i32_293] : memref<6x!tpu.dma_semaphore, #tpu.memory_space<semaphore_mem>> -> memref<1x!tpu.dma_semaphore, #tpu.memory_space<semaphore_mem>>
    %333 = tpu.memref_squeeze %332 : memref<1x!tpu.dma_semaphore, #tpu.memory_space<semaphore_mem>> -> memref<!tpu.dma_semaphore, #tpu.memory_space<semaphore_mem>>
    tpu.wait_dma2 semaphore(%333 : memref<!tpu.dma_semaphore, #tpu.memory_space<semaphore_mem>>) src(%329 : memref<432x128xf32, #tpu.memory_space<any>>) dst(%331 : memref<432x128xf32, #tpu.memory_space<vmem>>)
    %c5 = arith.constant 5 : index
    %c0_298 = arith.constant 0 : index
    %c0_299 = arith.constant 0 : index
    %334 = vector.load %arg7[%c5, %c0_298, %c0_299] : memref<6x432x128xf32, #tpu.memory_space<vmem>>, vector<1x16x128xf32>
    %335 = vector.shape_cast %334 : vector<1x16x128xf32> to vector<16x128xf32>
    %c5_300 = arith.constant 5 : index
    %c16_301 = arith.constant 16 : index
    %c0_302 = arith.constant 0 : index
    %336 = vector.load %arg7[%c5_300, %c16_301, %c0_302] : memref<6x432x128xf32, #tpu.memory_space<vmem>>, vector<1x1x128xf32>
    %337 = vector.shape_cast %336 : vector<1x1x128xf32> to vector<1x128xf32>
    %cst_303 = arith.constant dense<0.000000e+00> : vector<8x128xf32>
    %338 = tpu.matmul %326, %335, %cst_303 {dimension_numbers = #tpu.dot_dimension_numbers<[1], [0], [0], [1], [0, 0, 1, 1], [], []>} : vector<8x16xf32>, vector<16x128xf32>, vector<8x128xf32> -> vector<8x128xf32>
    %339 = vector.broadcast %337 : vector<1x128xf32> to vector<8x128xf32>
    %340 = arith.addf %338, %339 : vector<8x128xf32>
    %cst_304 = arith.constant 0.000000e+00 : f32
    %341 = vector.broadcast %cst_304 : f32 to vector<8x128xf32>
    %342 = arith.maximumf %340, %341 : vector<8x128xf32>
    %c5_305 = arith.constant 5 : index
    %c24_306 = arith.constant 24 : index
    %c0_307 = arith.constant 0 : index
    %343 = vector.load %arg7[%c5_305, %c24_306, %c0_307] : memref<6x432x128xf32, #tpu.memory_space<vmem>>, vector<1x128x128xf32>
    %344 = vector.shape_cast %343 : vector<1x128x128xf32> to vector<128x128xf32>
    %c5_308 = arith.constant 5 : index
    %c152_309 = arith.constant 152 : index
    %c0_310 = arith.constant 0 : index
    %345 = vector.load %arg7[%c5_308, %c152_309, %c0_310] : memref<6x432x128xf32, #tpu.memory_space<vmem>>, vector<1x1x128xf32>
    %346 = vector.shape_cast %345 : vector<1x1x128xf32> to vector<1x128xf32>
    %cst_311 = arith.constant dense<0.000000e+00> : vector<8x128xf32>
    %347 = tpu.matmul %342, %344, %cst_311 {dimension_numbers = #tpu.dot_dimension_numbers<[1], [0], [0], [1], [0, 0, 1, 1], [], []>} : vector<8x128xf32>, vector<128x128xf32>, vector<8x128xf32> -> vector<8x128xf32>
    %348 = vector.broadcast %346 : vector<1x128xf32> to vector<8x128xf32>
    %349 = arith.addf %347, %348 : vector<8x128xf32>
    %cst_312 = arith.constant 0.000000e+00 : f32
    %350 = vector.broadcast %cst_312 : f32 to vector<8x128xf32>
    %351 = arith.maximumf %349, %350 : vector<8x128xf32>
    %c5_313 = arith.constant 5 : index
    %c160_314 = arith.constant 160 : index
    %c0_315 = arith.constant 0 : index
    %352 = vector.load %arg7[%c5_313, %c160_314, %c0_315] : memref<6x432x128xf32, #tpu.memory_space<vmem>>, vector<1x128x128xf32>
    %353 = vector.shape_cast %352 : vector<1x128x128xf32> to vector<128x128xf32>
    %c5_316 = arith.constant 5 : index
    %c288_317 = arith.constant 288 : index
    %c0_318 = arith.constant 0 : index
    %354 = vector.load %arg7[%c5_316, %c288_317, %c0_318] : memref<6x432x128xf32, #tpu.memory_space<vmem>>, vector<1x1x128xf32>
    %355 = vector.shape_cast %354 : vector<1x1x128xf32> to vector<1x128xf32>
    %cst_319 = arith.constant dense<0.000000e+00> : vector<8x128xf32>
    %356 = tpu.matmul %351, %353, %cst_319 {dimension_numbers = #tpu.dot_dimension_numbers<[1], [0], [0], [1], [0, 0, 1, 1], [], []>} : vector<8x128xf32>, vector<128x128xf32>, vector<8x128xf32> -> vector<8x128xf32>
    %357 = vector.broadcast %355 : vector<1x128xf32> to vector<8x128xf32>
    %358 = arith.addf %356, %357 : vector<8x128xf32>
    %cst_320 = arith.constant 0.000000e+00 : f32
    %359 = vector.broadcast %cst_320 : f32 to vector<8x128xf32>
    %360 = arith.maximumf %358, %359 : vector<8x128xf32>
    %c5_321 = arith.constant 5 : index
    %c296_322 = arith.constant 296 : index
    %c0_323 = arith.constant 0 : index
    %361 = vector.load %arg7[%c5_321, %c296_322, %c0_323] : memref<6x432x128xf32, #tpu.memory_space<vmem>>, vector<1x128x128xf32>
    %362 = vector.shape_cast %361 : vector<1x128x128xf32> to vector<128x128xf32>
    %c5_324 = arith.constant 5 : index
    %c424_325 = arith.constant 424 : index
    %c0_326 = arith.constant 0 : index
    %363 = vector.load %arg7[%c5_324, %c424_325, %c0_326] : memref<6x432x128xf32, #tpu.memory_space<vmem>>, vector<1x1x128xf32>
    %364 = vector.shape_cast %363 : vector<1x1x128xf32> to vector<1x128xf32>
    %cst_327 = arith.constant dense<0.000000e+00> : vector<8x128xf32>
    %365 = tpu.matmul %360, %362, %cst_327 {dimension_numbers = #tpu.dot_dimension_numbers<[1], [0], [0], [1], [0, 0, 1, 1], [], []>} : vector<8x128xf32>, vector<128x128xf32>, vector<8x128xf32> -> vector<8x128xf32>
    %366 = vector.broadcast %364 : vector<1x128xf32> to vector<8x128xf32>
    %367 = arith.addf %365, %366 : vector<8x128xf32>
    %cst_328 = arith.constant 0.000000e+00 : f32
    %368 = vector.broadcast %cst_328 : f32 to vector<8x128xf32>
    %369 = arith.maximumf %367, %368 : vector<8x128xf32>
    %c5_329 = arith.constant 5 : index
    %c0_330 = arith.constant 0 : index
    %c0_331 = arith.constant 0 : index
    %370 = vector.load %arg3[%c5_329, %c0_330, %c0_331] : memref<6x128x8xf32, #tpu.memory_space<vmem>>, vector<1x128x8xf32>
    %371 = vector.shape_cast %370 : vector<1x128x8xf32> to vector<128x8xf32>
    %cst_332 = arith.constant dense<0.000000e+00> : vector<8x8xf32>
    %372 = tpu.matmul %369, %371, %cst_332 {dimension_numbers = #tpu.dot_dimension_numbers<[1], [0], [0], [1], [0, 0, 1, 1], [], []>} : vector<8x128xf32>, vector<128x8xf32>, vector<8x8xf32> -> vector<8x8xf32>
    %c5_333 = arith.constant 5 : index
    %c0_334 = arith.constant 0 : index
    %c0_335 = arith.constant 0 : index
    %373 = vector.load %arg5[%c5_333, %c0_334, %c0_335] : memref<6x1x8xf32, #tpu.memory_space<vmem>>, vector<1x1x8xf32>
    %374 = vector.shape_cast %373 : vector<1x1x8xf32> to vector<1x8xf32>
    %375 = vector.broadcast %374 : vector<1x8xf32> to vector<8x8xf32>
    %376 = arith.addf %372, %375 : vector<8x8xf32>
    %377 = arith.addf %327, %376 : vector<8x8xf32>
    %c0_336 = arith.constant 0 : index
    %c0_337 = arith.constant 0 : index
    %378 = vector.load %arg6[%c0_336, %c0_337] : memref<8x8xf32, #tpu.memory_space<vmem>>, vector<8x8xf32>
    tpu.vector_store %arg6[%c0_336, %c0_337], %377 {strides = array<i32>} : memref<8x8xf32, #tpu.memory_space<vmem>>, vector<8x8xf32>,
    return
  }
}

</mosaic_0001>

<llo_original>
// kernel: nbeats_forward.1
$region0: #{nbeats_forward.1}
  #allocation0 [shape = 'u32[]', space=smem, size = 0x4, offset = 0x4, fixed_abs, tag = 'smem constant byte address 0x4 - core index']
  #allocation1 [shape = 'u32[72,128]{1,0:T(1,128)}', space=vmem, size = 0x9000, scoped, tag = 'internal scratch']
  #allocation2 [shape = 'f32[6,432,128]{2,1,0:T(8,128)}', space=vmem, size = 0x144000, scoped, tag = 'scratch operand']
  #allocation3 [shape = 's32[6]{0}', space=sflag, size = 0x18, scoped, tag = 'scratch operand']
  #allocation11 [shape = 's32[]', space=sflag, size = 0x4, offset = 0, fixed_abs, tag = 'sflag constant byte address 0x0 - dummy sync flag']
  #allocation12 [shape = 's32[]', space=sflag, size = 0x4, offset = 0, fixed_abs, tag = 'sflag constant byte address 0x0 - dummy sync flag']
  #allocation13 [shape = 'u32[]', space=smem, size = 0x4, offset = 0x44, fixed_abs, tag = 'smem constant byte address 0x44 - assertion arg 0']
  #allocation14 [shape = 'u32[]', space=smem, size = 0x4, offset = 0x48, fixed_abs, tag = 'smem constant byte address 0x48 - assertion arg 1']
  #allocation15 [shape = 's32[]', space=sflag, size = 0x4, offset = 0, fixed_abs, tag = 'sflag constant byte address 0x0 - dummy sync flag']
  #allocation16 [shape = 's32[]', space=sflag, size = 0x4, offset = 0, fixed_abs, tag = 'sflag constant byte address 0x0 - dummy sync flag']
  #allocation17 [shape = 's32[]', space=sflag, size = 0x4, offset = 0, fixed_abs, tag = 'sflag constant byte address 0x0 - dummy sync flag']
  #allocation18 [shape = 's32[]', space=sflag, size = 0x4, offset = 0, fixed_abs, tag = 'sflag constant byte address 0x0 - dummy sync flag']
  #allocation19 [shape = 's32[]', space=sflag, size = 0x4, offset = 0, fixed_abs, tag = 'sflag constant byte address 0x0 - dummy sync flag']
  #allocation20 [shape = 's32[]', space=sflag, size = 0x4, offset = 0, fixed_abs, tag = 'sflag constant byte address 0x0 - dummy sync flag']
  #allocation21 [shape = 's32[]', space=sflag, size = 0x4, offset = 0, fixed_abs, tag = 'sflag constant byte address 0x0 - dummy sync flag']
  #allocation22 [shape = 's32[]', space=sflag, size = 0x4, offset = 0, fixed_abs, tag = 'sflag constant byte address 0x0 - dummy sync flag']
  #allocation23 [shape = 's32[]', space=sflag, size = 0x4, offset = 0, fixed_abs, tag = 'sflag constant byte address 0x0 - dummy sync flag']
  #allocation24 [shape = 's32[]', space=sflag, size = 0x4, offset = 0, fixed_abs, tag = 'sflag constant byte address 0x0 - dummy sync flag']
  %s0 = inlined_call_operand.hbm [shape: f32[8,16], index: 0, kind: input, shape index: {}]
  %s1 = inlined_call_operand.hbm [shape: f32[6,432,128], index: 1, kind: input, shape index: {}]
  %s2 = inlined_call_operand.vmem [shape: f32[6,128,16], index: 2, kind: input, shape index: {}]
  %s3 = inlined_call_operand.vmem [shape: f32[6,128,8], index: 3, kind: input, shape index: {}]
  %s4 = inlined_call_operand.hbm [shape: f32[6,1,16], index: 4, kind: input, shape index: {}]
  %s5 = inlined_call_operand.hbm [shape: f32[6,1,8], index: 5, kind: input, shape index: {}]
  %s6 = inlined_call_operand.hbm [shape: f32[8,8], index: 6, kind: output, shape index: {}]
  %s7 = sld [smem:[#allocation0]]
  $region66: #{nbeats_forward.1} parent=0
    _
  %s9 = ssub.s32 1, %s7
  %s10 = scalar_select 0, %s9, %s7
  $region1: #{nbeats_forward.1} parent=0
    #allocation4 [shape = 'u8[4096]{0}', space=vmem, size = 0x1000, scoped, tag = 'input window, operand 0, single buffered']
    #allocation5 [shape = 's32[1]{0}', space=sflag, size = 0x4, scoped, tag = 'scoped memory for nbeats_forward.1']
    #allocation6 [shape = 's32[1]{0}', space=sflag, size = 0x4, scoped, tag = 'scoped memory for nbeats_forward.1']
    #allocation7 [shape = 'u8[3072]{0}', space=vmem, size = 0xc00, scoped, tag = 'input window, operand 4, single buffered']
    #allocation8 [shape = 's32[1]{0}', space=sflag, size = 0x4, scoped, tag = 'scoped memory for nbeats_forward.1']
    #allocation9 [shape = 'u8[3072]{0}', space=vmem, size = 0xc00, scoped, tag = 'input window, operand 5, single buffered']
    #allocation10 [shape = 'u8[4096]{0}', space=vmem, size = 0x1000, scoped, tag = 'output window, operand 0, single buffered']
    %11 = vsyncpa [#allocation5], 0
    %12 = vsyncpa [#allocation8], 0
    %13 = vsyncpa [#allocation6], 0
    // Predicated region
    $region2: #{nbeats_forward.1} parent=1 // pred_check
      _
    $region3: #{nbeats_forward.1} parent=1 // pred_check_branch
      %15 = sbr.rel (0) target = $region5
    $region4: #{nbeats_forward.1} parent=1 // pred_region
      %17 = vsyncadd [#allocation5], 0
      %s19 = sshll.u32 %s0, 4
      %s20 = int_to_ptr.hbm [resolvable:$true] %s19
      %s21 = sshll.u32 [#allocation4], 4
      %s22 = int_to_ptr.vmem [resolvable:$true] %s21
      %24 = dma.hbm_to_vmem [thread:$0]  %s20, 128, %s22, [#allocation5]
    $region5: #{nbeats_forward.1} parent=1 // pred_fallthru
      _
    // Predicated region
    $region6: #{nbeats_forward.1} parent=1 // pred_check
      _
    $region7: #{nbeats_forward.1} parent=1 // pred_check_branch
      %26 = sbr.rel (0) target = $region9
    $region8: #{nbeats_forward.1} parent=1 // pred_region
      _
    $region9: #{nbeats_forward.1} parent=1 // pred_fallthru
      _
    // Predicated region
    $region10: #{nbeats_forward.1} parent=1 // pred_check
      _
    $region11: #{nbeats_forward.1} parent=1 // pred_check_branch
      %28 = sbr.rel (0) target = $region13
    $region12: #{nbeats_forward.1} parent=1 // pred_region
      _
    $region13: #{nbeats_forward.1} parent=1 // pred_fallthru
      _
    // Predicated region
    $region14: #{nbeats_forward.1} parent=1 // pred_check
      _
    $region15: #{nbeats_forward.1} parent=1 // pred_check_branch
      %30 = sbr.rel (0) target = $region17
    $region16: #{nbeats_forward.1} parent=1 // pred_region
      %32 = vsyncadd [#allocation8], 0
      %s33 = sshll.u32 %s4, 4
      %s34 = int_to_ptr.hbm [resolvable:$true] %s33
      %s35 = sshll.u32 [#allocation7], 4
      %s36 = int_to_ptr.vmem [resolvable:$true] %s35
      %41 = dma.hbm_to_vmem [thread:$0]  %s34, 96, %s36, [#allocation8], 16, 16, 1
    $region17: #{nbeats_forward.1} parent=1 // pred_fallthru
      _
    // Predicated region
    $region18: #{nbeats_forward.1} parent=1 // pred_check
      _
    $region19: #{nbeats_forward.1} parent=1 // pred_check_branch
      %43 = sbr.rel (0) target = $region21
    $region20: #{nbeats_forward.1} parent=1 // pred_region
      %45 = vsyncadd [#allocation8], 0
      %s46 = sshll.u32 %s5, 4
      %s47 = int_to_ptr.hbm [resolvable:$true] %s46
      %s48 = sshll.u32 [#allocation9], 4
      %s49 = int_to_ptr.vmem [resolvable:$true] %s48
      %54 = dma.hbm_to_vmem [thread:$0]  %s47, 96, %s49, [#allocation8], 16, 16, 1
    $region21: #{nbeats_forward.1} parent=1 // pred_fallthru
      _
    // Predicated region
    $region22: #{nbeats_forward.1} parent=1 // pred_check
      _
    $region23: #{nbeats_forward.1} parent=1 // pred_check_branch
      %56 = sbr.rel (0) target = $region25
    $region24: #{nbeats_forward.1} parent=1 // pred_region
      %58 = dma.done [#allocation5], 128
    $region25: #{nbeats_forward.1} parent=1 // pred_fallthru
      _
    // Predicated region
    $region26: #{nbeats_forward.1} parent=1 // pred_check
      _
    $region27: #{nbeats_forward.1} parent=1 // pred_check_branch
      %60 = sbr.rel (0) target = $region29
    $region28: #{nbeats_forward.1} parent=1 // pred_region
      %62 = dma.done [#allocation8], 96
    $region29: #{nbeats_forward.1} parent=1 // pred_fallthru
      _
    // Predicated region
    $region30: #{nbeats_forward.1} parent=1 // pred_check
      _
    $region31: #{nbeats_forward.1} parent=1 // pred_check_branch
      %64 = sbr.rel (0) target = $region33
    $region32: #{nbeats_forward.1} parent=1 // pred_region
      %66 = dma.done [#allocation8], 96
    $region33: #{nbeats_forward.1} parent=1 // pred_fallthru
      _
    // Predicated region
    $region34: #{nbeats_forward.1} parent=1 // pred_check
      _
    $region35: #{nbeats_forward.1} parent=1 // pred_check_branch
      %68 = sbr.rel target = $region37
    $region36: #{nbeats_forward.1} parent=1 // pred_region
      %69 = sst [smem:[#allocation13]] [#allocation12]
      %70 = sst [smem:[#allocation14]] [#allocation11]
    $region37: #{nbeats_forward.1} parent=1 // pred_fallthru
      _
    %72 = shalt.err (0)
    %s74 = sshll.u32 %s1, 4
    %s75 = int_to_ptr.hbm [resolvable:$true] %s74
    %s76 = sshll.u32 [#allocation2], 4
    %s77 = int_to_ptr.vmem [resolvable:$true] %s76
    %79 = dma.hbm_to_vmem [thread:$0]  %s75, 6912, %s77, [#allocation3]
    %s80 = scalar_lea.hbm %s1, 432
    %s81 = scalar_lea.vmem [#allocation2], 432
    %s82 = scalar_lea.sflag [#allocation3], 1
    // Predicated region
    $region38: #{nbeats_forward.1} parent=1 // pred_check
      _
    $region39: #{nbeats_forward.1} parent=1 // pred_check_branch
      %84 = sbr.rel target = $region41
    $region40: #{nbeats_forward.1} parent=1 // pred_region
      %85 = sst [smem:[#allocation13]] [#allocation16]
      %86 = sst [smem:[#allocation14]] [#allocation15]
    $region41: #{nbeats_forward.1} parent=1 // pred_fallthru
      _
    %88 = shalt.err (0)
    %s90 = sshll.u32 %s80, 4
    %s91 = int_to_ptr.hbm [resolvable:$true] %s90
    %s92 = sshll.u32 %s81, 4
    %s93 = int_to_ptr.vmem [resolvable:$true] %s92
    %95 = dma.hbm_to_vmem [thread:$0]  %s91, 6912, %s93, %s82
    %s96 = scalar_lea.hbm %s1, 864
    %s97 = scalar_lea.vmem [#allocation2], 864
    %s98 = scalar_lea.sflag [#allocation3], 2
    // Predicated region
    $region42: #{nbeats_forward.1} parent=1 // pred_check
      _
    $region43: #{nbeats_forward.1} parent=1 // pred_check_branch
      %100 = sbr.rel target = $region45
    $region44: #{nbeats_forward.1} parent=1 // pred_region
      %101 = sst [smem:[#allocation13]] [#allocation18]
      %102 = sst [smem:[#allocation14]] [#allocation17]
    $region45: #{nbeats_forward.1} parent=1 // pred_fallthru
      _
    %104 = shalt.err (0)
    %s106 = sshll.u32 %s96, 4
    %s107 = int_to_ptr.hbm [resolvable:$true] %s106
    %s108 = sshll.u32 %s97, 4
    %s109 = int_to_ptr.vmem [resolvable:$true] %s108
    %111 = dma.hbm_to_vmem [thread:$0]  %s107, 6912, %s109, %s98
    %s112 = scalar_lea.hbm %s1, 1296
    %s113 = scalar_lea.vmem [#allocation2], 1296
    %s114 = scalar_lea.sflag [#allocation3], 3
    // Predicated region
    $region46: #{nbeats_forward.1} parent=1 // pred_check
      _
    $region47: #{nbeats_forward.1} parent=1 // pred_check_branch
      %116 = sbr.rel target = $region49
    $region48: #{nbeats_forward.1} parent=1 // pred_region
      %117 = sst [smem:[#allocation13]] [#allocation20]
      %118 = sst [smem:[#allocation14]] [#allocation19]
    $region49: #{nbeats_forward.1} parent=1 // pred_fallthru
      _
    %120 = shalt.err (0)
    %s122 = sshll.u32 %s112, 4
    %s123 = int_to_ptr.hbm [resolvable:$true] %s122
    %s124 = sshll.u32 %s113, 4
    %s125 = int_to_ptr.vmem [resolvable:$true] %s124
    %127 = dma.hbm_to_vmem [thread:$0]  %s123, 6912, %s125, %s114
    %s128 = scalar_lea.hbm %s1, 1728
    %s129 = scalar_lea.vmem [#allocation2], 1728
    %s130 = scalar_lea.sflag [#allocation3], 4
    // Predicated region
    $region50: #{nbeats_forward.1} parent=1 // pred_check
      _
    $region51: #{nbeats_forward.1} parent=1 // pred_check_branch
      %132 = sbr.rel target = $region53
    $region52: #{nbeats_forward.1} parent=1 // pred_region
      %133 = sst [smem:[#allocation13]] [#allocation22]
      %134 = sst [smem:[#allocation14]] [#allocation21]
    $region53: #{nbeats_forward.1} parent=1 // pred_fallthru
      _
    %136 = shalt.err (0)
    %s138 = sshll.u32 %s128, 4
    %s139 = int_to_ptr.hbm [resolvable:$true] %s138
    %s140 = sshll.u32 %s129, 4
    %s141 = int_to_ptr.vmem [resolvable:$true] %s140
    %143 = dma.hbm_to_vmem [thread:$0]  %s139, 6912, %s141, %s130
    %s144 = scalar_lea.hbm %s1, 2160
    %s145 = scalar_lea.vmem [#allocation2], 2160
    %s146 = scalar_lea.sflag [#allocation3], 5
    // Predicated region
    $region54: #{nbeats_forward.1} parent=1 // pred_check
      _
    $region55: #{nbeats_forward.1} parent=1 // pred_check_branch
      %148 = sbr.rel target = $region57
    $region56: #{nbeats_forward.1} parent=1 // pred_region
      %149 = sst [smem:[#allocation13]] [#allocation24]
      %150 = sst [smem:[#allocation14]] [#allocation23]
    $region57: #{nbeats_forward.1} parent=1 // pred_fallthru
      _
    %152 = shalt.err (0)
    %s154 = sshll.u32 %s144, 4
    %s155 = int_to_ptr.hbm [resolvable:$true] %s154
    %s156 = sshll.u32 %s145, 4
    %s157 = int_to_ptr.vmem [resolvable:$true] %s156
    %159 = dma.hbm_to_vmem [thread:$0]  %s155, 6912, %s157, %s146
    %v160 = vld [vmem:[#allocation4] sm:$0xff]
    %s161 = smul.u32 432, 1
    %s162 = sshll.u32 %s161, 4
    %163 = dma.done [#allocation3], %s162
    %v164 = vld [vmem:[#allocation2] sm:$0xff]
    %v165 = vld [vmem:[#allocation2 + $0x8] sm:$0xff]
    %v166 = vld [vmem:[#allocation2 + $0x10] sm:$0x1]
    %v167 = vperm.slane %v166, 0
    %vm168 = vcmask 130048
    %v170 = vsel %vm168, %v160, 0
    %172 = vmatpush.msra.mxu0 0.0
    %173 = vmatpush.msra.mxu0 0.0
    %174 = vmatpush.msra.mxu0 0.0
    %175 = vmatpush.msra.mxu0 0.0
    %176 = vmatpush.msra.mxu0 0.0
    %177 = vmatpush.msra.mxu0 0.0
    %178 = vmatpush.msra.mxu0 0.0
    %179 = vmatpush.msra.mxu0 0.0
    %180 = vmatpush.msra.mxu0 0.0
    %181 = vmatpush.msra.mxu0 0.0
    %182 = vmatpush.msra.mxu0 0.0
    %183 = vmatpush.msra.mxu0 0.0
    %184 = vmatpush.msra.mxu0 0.0
    %185 = vmatpush.msra.mxu0 0.0
    %186 = vmatpush.msra.mxu0 %v165
    %187 = vmatpush.msra.mxu0 %v164
    %188 = vmatmul.f32.gmra.mxu0 %v170
    %v189 = vpop.f32.mrf.mxu0
    %v190 = vadd.f32 %v167, %v189
    %191 = vdwg.mxu0
    %v192 = vmax.f32 %v190, 0.0
    %v193 = vld [vmem:[#allocation2 + $0x18] sm:$0xff]
    %v194 = vld [vmem:[#allocation2 + $0x20] sm:$0xff]
    %v195 = vld [vmem:[#allocation2 + $0x28] sm:$0xff]
    %v196 = vld [vmem:[#allocation2 + $0x30] sm:$0xff]
    %v197 = vld [vmem:[#allocation2 + $0x38] sm:$0xff]
    %v198 = vld [vmem:[#allocation2 + $0x40] sm:$0xff]
    %v199 = vld [vmem:[#allocation2 + $0x48] sm:$0xff]
    %v200 = vld [vmem:[#allocation2 + $0x50] sm:$0xff]
    %v201 = vld [vmem:[#allocation2 + $0x58] sm:$0xff]
    %v202 = vld [vmem:[#allocation2 + $0x60] sm:$0xff]
    %v203 = vld [vmem:[#allocation2 + $0x68] sm:$0xff]
    %v204 = vld [vmem:[#allocation2 + $0x70] sm:$0xff]
    %v205 = vld [vmem:[#allocation2 + $0x78] sm:$0xff]
    %v206 = vld [vmem:[#allocation2 + $0x80] sm:$0xff]
    %v207 = vld [vmem:[#allocation2 + $0x88] sm:$0xff]
    %v208 = vld [vmem:[#allocation2 + $0x90] sm:$0xff]
    %v209 = vld [vmem:[#allocation2 + $0x98] sm:$0x1]
    %v210 = vperm.slane %v209, 0
    %211 = vmatpush.msra.mxu0 %v208
    %212 = vmatpush.msra.mxu0 %v207
    %213 = vmatpush.msra.mxu0 %v206
    %214 = vmatpush.msra.mxu0 %v205
    %215 = vmatpush.msra.mxu0 %v204
    %216 = vmatpush.msra.mxu0 %v203
    %217 = vmatpush.msra.mxu0 %v202
    %218 = vmatpush.msra.mxu0 %v201
    %219 = vmatpush.msra.mxu0 %v200
    %220 = vmatpush.msra.mxu0 %v199
    %221 = vmatpush.msra.mxu0 %v198
    %222 = vmatpush.msra.mxu0 %v197
    %223 = vmatpush.msra.mxu0 %v196
    %224 = vmatpush.msra.mxu0 %v195
    %225 = vmatpush.msra.mxu0 %v194
    %226 = vmatpush.msra.mxu0 %v193
    %227 = vmatmul.f32.gmra.mxu0 %v192
    %v228 = vpop.f32.mrf.mxu0
    %v229 = vadd.f32 %v210, %v228
    %230 = vdwg.mxu0
    %v231 = vmax.f32 %v229, 0.0
    %v232 = vld [vmem:[#allocation2 + $0xa0] sm:$0xff]
    %v233 = vld [vmem:[#allocation2 + $0xa8] sm:$0xff]
    %v234 = vld [vmem:[#allocation2 + $0xb0] sm:$0xff]
    %v235 = vld [vmem:[#allocation2 + $0xb8] sm:$0xff]
    %v236 = vld [vmem:[#allocation2 + $0xc0] sm:$0xff]
    %v237 = vld [vmem:[#allocation2 + $0xc8] sm:$0xff]
    %v238 = vld [vmem:[#allocation2 + $0xd0] sm:$0xff]
    %v239 = vld [vmem:[#allocation2 + $0xd8] sm:$0xff]
    %v240 = vld [vmem:[#allocation2 + $0xe0] sm:$0xff]
    %v241 = vld [vmem:[#allocation2 + $0xe8] sm:$0xff]
    %v242 = vld [vmem:[#allocation2 + $0xf0] sm:$0xff]
    %v243 = vld [vmem:[#allocation2 + $0xf8] sm:$0xff]
    %v244 = vld [vmem:[#allocation2 + $0x100] sm:$0xff]
    %v245 = vld [vmem:[#allocation2 + $0x108] sm:$0xff]
    %v246 = vld [vmem:[#allocation2 + $0x110] sm:$0xff]
    %v247 = vld [vmem:[#allocation2 + $0x118] sm:$0xff]
    %v248 = vld [vmem:[#allocation2 + $0x120] sm:$0x1]
    %v249 = vperm.slane %v248, 0
    %250 = vmatpush.msra.mxu0 %v247
    %251 = vmatpush.msra.mxu0 %v246
    %252 = vmatpush.msra.mxu0 %v245
    %253 = vmatpush.msra.mxu0 %v244
    %254 = vmatpush.msra.mxu0 %v243
    %255 = vmatpush.msra.mxu0 %v242
    %256 = vmatpush.msra.mxu0 %v241
    %257 = vmatpush.msra.mxu0 %v240
    %258 = vmatpush.msra.mxu0 %v239
    %259 = vmatpush.msra.mxu0 %v238
    %260 = vmatpush.msra.mxu0 %v237
    %261 = vmatpush.msra.mxu0 %v236
    %262 = vmatpush.msra.mxu0 %v235
    %263 = vmatpush.msra.mxu0 %v234
    %264 = vmatpush.msra.mxu0 %v233
    %265 = vmatpush.msra.mxu0 %v232
    %266 = vmatmul.f32.gmra.mxu0 %v231
    %v267 = vpop.f32.mrf.mxu0
    %v268 = vadd.f32 %v249, %v267
    %269 = vdwg.mxu0
    %v270 = vmax.f32 %v268, 0.0
    %v271 = vld [vmem:[#allocation2 + $0x128] sm:$0xff]
    %v272 = vld [vmem:[#allocation2 + $0x130] sm:$0xff]
    %v273 = vld [vmem:[#allocation2 + $0x138] sm:$0xff]
    %v274 = vld [vmem:[#allocation2 + $0x140] sm:$0xff]
    %v275 = vld [vmem:[#allocation2 + $0x148] sm:$0xff]
    %v276 = vld [vmem:[#allocation2 + $0x150] sm:$0xff]
    %v277 = vld [vmem:[#allocation2 + $0x158] sm:$0xff]
    %v278 = vld [vmem:[#allocation2 + $0x160] sm:$0xff]
    %v279 = vld [vmem:[#allocation2 + $0x168] sm:$0xff]
    %v280 = vld [vmem:[#allocation2 + $0x170] sm:$0xff]
    %v281 = vld [vmem:[#allocation2 + $0x178] sm:$0xff]
    %v282 = vld [vmem:[#allocation2 + $0x180] sm:$0xff]
    %v283 = vld [vmem:[#allocation2 + $0x188] sm:$0xff]
    %v284 = vld [vmem:[#allocation2 + $0x190] sm:$0xff]
    %v285 = vld [vmem:[#allocation2 + $0x198] sm:$0xff]
    %v286 = vld [vmem:[#allocation2 + $0x1a0] sm:$0xff]
    %v287 = vld [vmem:[#allocation2 + $0x1a8] sm:$0x1]
    %v288 = vperm.slane %v287, 0
    %289 = vmatpush.msra.mxu0 %v286
    %290 = vmatpush.msra.mxu0 %v285
    %291 = vmatpush.msra.mxu0 %v284
    %292 = vmatpush.msra.mxu0 %v283
    %293 = vmatpush.msra.mxu0 %v282
    %294 = vmatpush.msra.mxu0 %v281
    %295 = vmatpush.msra.mxu0 %v280
    %296 = vmatpush.msra.mxu0 %v279
    %297 = vmatpush.msra.mxu0 %v278
    %298 = vmatpush.msra.mxu0 %v277
    %299 = vmatpush.msra.mxu0 %v276
    %300 = vmatpush.msra.mxu0 %v275
    %301 = vmatpush.msra.mxu0 %v274
    %302 = vmatpush.msra.mxu0 %v273
    %303 = vmatpush.msra.mxu0 %v272
    %304 = vmatpush.msra.mxu0 %v271
    %305 = vmatmul.f32.gmra.mxu0 %v270
    %v306 = vpop.f32.mrf.mxu0
    %v307 = vadd.f32 %v288, %v306
    %308 = vdwg.mxu0
    %v309 = vmax.f32 %v307, 0.0
    %v310 = vld [vmem:[%s2] sm:$0xff]
    %v311 = vld [vmem:[%s2 + $0x8] sm:$0xff]
    %v312 = vld [vmem:[%s2 + $0x10] sm:$0xff]
    %v313 = vld [vmem:[%s2 + $0x18] sm:$0xff]
    %v314 = vld [vmem:[%s2 + $0x20] sm:$0xff]
    %v315 = vld [vmem:[%s2 + $0x28] sm:$0xff]
    %v316 = vld [vmem:[%s2 + $0x30] sm:$0xff]
    %v317 = vld [vmem:[%s2 + $0x38] sm:$0xff]
    %v318 = vld [vmem:[%s2 + $0x40] sm:$0xff]
    %v319 = vld [vmem:[%s2 + $0x48] sm:$0xff]
    %v320 = vld [vmem:[%s2 + $0x50] sm:$0xff]
    %v321 = vld [vmem:[%s2 + $0x58] sm:$0xff]
    %v322 = vld [vmem:[%s2 + $0x60] sm:$0xff]
    %v323 = vld [vmem:[%s2 + $0x68] sm:$0xff]
    %v324 = vld [vmem:[%s2 + $0x70] sm:$0xff]
    %v325 = vld [vmem:[%s2 + $0x78] sm:$0xff]
    %v326 = vld [vmem:[#allocation7] sm:$0x1]
    %v328 = vperm.slane %v326, 0
    %330 = vmatpush.msra.mxu0 %v325
    %331 = vmatpush.msra.mxu0 %v324
    %332 = vmatpush.msra.mxu0 %v323
    %333 = vmatpush.msra.mxu0 %v322
    %334 = vmatpush.msra.mxu0 %v321
    %335 = vmatpush.msra.mxu0 %v320
    %336 = vmatpush.msra.mxu0 %v319
    %337 = vmatpush.msra.mxu0 %v318
    %338 = vmatpush.msra.mxu0 %v317
    %339 = vmatpush.msra.mxu0 %v316
    %340 = vmatpush.msra.mxu0 %v315
    %341 = vmatpush.msra.mxu0 %v314
    %342 = vmatpush.msra.mxu0 %v313
    %343 = vmatpush.msra.mxu0 %v312
    %344 = vmatpush.msra.mxu0 %v311
    %345 = vmatpush.msra.mxu0 %v310
    %346 = vmatmul.f32.gmra.mxu0 %v309
    %v347 = vpop.f32.mrf.mxu0
    %v348 = vadd.f32 %v328, %v347
    %349 = vdwg.mxu0
    %v350 = vld [vmem:[%s3] sm:$0xff]
    %v351 = vld [vmem:[%s3 + $0x8] sm:$0xff]
    %v352 = vld [vmem:[%s3 + $0x10] sm:$0xff]
    %v353 = vld [vmem:[%s3 + $0x18] sm:$0xff]
    %v354 = vld [vmem:[%s3 + $0x20] sm:$0xff]
    %v355 = vld [vmem:[%s3 + $0x28] sm:$0xff]
    %v356 = vld [vmem:[%s3 + $0x30] sm:$0xff]
    %v357 = vld [vmem:[%s3 + $0x38] sm:$0xff]
    %v358 = vld [vmem:[%s3 + $0x40] sm:$0xff]
    %v359 = vld [vmem:[%s3 + $0x48] sm:$0xff]
    %v360 = vld [vmem:[%s3 + $0x50] sm:$0xff]
    %v361 = vld [vmem:[%s3 + $0x58] sm:$0xff]
    %v362 = vld [vmem:[%s3 + $0x60] sm:$0xff]
    %v363 = vld [vmem:[%s3 + $0x68] sm:$0xff]
    %v364 = vld [vmem:[%s3 + $0x70] sm:$0xff]
    %v365 = vld [vmem:[%s3 + $0x78] sm:$0xff]
    %v366 = vld [vmem:[#allocation9] sm:$0x1]
    %v368 = vperm.slane %v366, 0
    %370 = vmatpush.msra.mxu0 %v365
    %371 = vmatpush.msra.mxu0 %v364
    %372 = vmatpush.msra.mxu0 %v363
    %373 = vmatpush.msra.mxu0 %v362
    %374 = vmatpush.msra.mxu0 %v361
    %375 = vmatpush.msra.mxu0 %v360
    %376 = vmatpush.msra.mxu0 %v359
    %377 = vmatpush.msra.mxu0 %v358
    %378 = vmatpush.msra.mxu0 %v357
    %379 = vmatpush.msra.mxu0 %v356
    %380 = vmatpush.msra.mxu0 %v355
    %381 = vmatpush.msra.mxu0 %v354
    %382 = vmatpush.msra.mxu0 %v353
    %383 = vmatpush.msra.mxu0 %v352
    %384 = vmatpush.msra.mxu0 %v351
    %385 = vmatpush.msra.mxu0 %v350
    %386 = vmatmul.f32.gmra.mxu0 %v309
    %v387 = vpop.f32.mrf.mxu0
    %v388 = vadd.f32 %v368, %v387
    %389 = vdwg.mxu0
    %v390 = vsub.f32 %v160, %v348
    %v391 = vadd.f32 %v388, 0.0
    %s392 = sshll.u32 %s161, 4
    %393 = dma.done %s82, %s392
    %v394 = vld [vmem:[%s81] sm:$0xff]
    %v395 = vld [vmem:[%s81 + $0x8] sm:$0xff]
    %v396 = vld [vmem:[%s81 + $0x10] sm:$0x1]
    %v397 = vperm.slane %v396, 0
    %v399 = vsel %vm168, %v390, 0
    %401 = vmatpush.msra.mxu0 0.0
    %402 = vmatpush.msra.mxu0 0.0
    %403 = vmatpush.msra.mxu0 0.0
    %404 = vmatpush.msra.mxu0 0.0
    %405 = vmatpush.msra.mxu0 0.0
    %406 = vmatpush.msra.mxu0 0.0
    %407 = vmatpush.msra.mxu0 0.0
    %408 = vmatpush.msra.mxu0 0.0
    %409 = vmatpush.msra.mxu0 0.0
    %410 = vmatpush.msra.mxu0 0.0
    %411 = vmatpush.msra.mxu0 0.0
    %412 = vmatpush.msra.mxu0 0.0
    %413 = vmatpush.msra.mxu0 0.0
    %414 = vmatpush.msra.mxu0 0.0
    %415 = vmatpush.msra.mxu0 %v395
    %416 = vmatpush.msra.mxu0 %v394
    %417 = vmatmul.f32.gmra.mxu0 %v399
    %v418 = vpop.f32.mrf.mxu0
    %v419 = vadd.f32 %v397, %v418
    %420 = vdwg.mxu0
    %v421 = vmax.f32 %v419, 0.0
    %v422 = vld [vmem:[%s81 + $0x18] sm:$0xff]
    %v423 = vld [vmem:[%s81 + $0x20] sm:$0xff]
    %v424 = vld [vmem:[%s81 + $0x28] sm:$0xff]
    %v425 = vld [vmem:[%s81 + $0x30] sm:$0xff]
    %v426 = vld [vmem:[%s81 + $0x38] sm:$0xff]
    %v427 = vld [vmem:[%s81 + $0x40] sm:$0xff]
    %v428 = vld [vmem:[%s81 + $0x48] sm:$0xff]
    %v429 = vld [vmem:[%s81 + $0x50] sm:$0xff]
    %v430 = vld [vmem:[%s81 + $0x58] sm:$0xff]
    %v431 = vld [vmem:[%s81 + $0x60] sm:$0xff]
    %v432 = vld [vmem:[%s81 + $0x68] sm:$0xff]
    %v433 = vld [vmem:[%s81 + $0x70] sm:$0xff]
    %v434 = vld [vmem:[%s81 + $0x78] sm:$0xff]
    %v435 = vld [vmem:[%s81 + $0x80] sm:$0xff]
    %v436 = vld [vmem:[%s81 + $0x88] sm:$0xff]
    %v437 = vld [vmem:[%s81 + $0x90] sm:$0xff]
    %v438 = vld [vmem:[%s81 + $0x98] sm:$0x1]
    %v439 = vperm.slane %v438, 0
    %440 = vmatpush.msra.mxu0 %v437
    %441 = vmatpush.msra.mxu0 %v436
    %442 = vmatpush.msra.mxu0 %v435
    %443 = vmatpush.msra.mxu0 %v434
    %444 = vmatpush.msra.mxu0 %v433
    %445 = vmatpush.msra.mxu0 %v432
    %446 = vmatpush.msra.mxu0 %v431
    %447 = vmatpush.msra.mxu0 %v430
    %448 = vmatpush.msra.mxu0 %v429
    %449 = vmatpush.msra.mxu0 %v428
    %450 = vmatpush.msra.mxu0 %v427
    %451 = vmatpush.msra.mxu0 %v426
    %452 = vmatpush.msra.mxu0 %v425
    %453 = vmatpush.msra.mxu0 %v424
    %454 = vmatpush.msra.mxu0 %v423
    %455 = vmatpush.msra.mxu0 %v422
    %456 = vmatmul.f32.gmra.mxu0 %v421
    %v457 = vpop.f32.mrf.mxu0
    %v458 = vadd.f32 %v439, %v457
    %459 = vdwg.mxu0
    %v460 = vmax.f32 %v458, 0.0
    %v461 = vld [vmem:[%s81 + $0xa0] sm:$0xff]
    %v462 = vld [vmem:[%s81 + $0xa8] sm:$0xff]
    %v463 = vld [vmem:[%s81 + $0xb0] sm:$0xff]
    %v464 = vld [vmem:[%s81 + $0xb8] sm:$0xff]
    %v465 = vld [vmem:[%s81 + $0xc0] sm:$0xff]
    %v466 = vld [vmem:[%s81 + $0xc8] sm:$0xff]
    %v467 = vld [vmem:[%s81 + $0xd0] sm:$0xff]
    %v468 = vld [vmem:[%s81 + $0xd8] sm:$0xff]
    %v469 = vld [vmem:[%s81 + $0xe0] sm:$0xff]
    %v470 = vld [vmem:[%s81 + $0xe8] sm:$0xff]
    %v471 = vld [vmem:[%s81 + $0xf0] sm:$0xff]
    %v472 = vld [vmem:[%s81 + $0xf8] sm:$0xff]
    %v473 = vld [vmem:[%s81 + $0x100] sm:$0xff]
    %v474 = vld [vmem:[%s81 + $0x108] sm:$0xff]
    %v475 = vld [vmem:[%s81 + $0x110] sm:$0xff]
    %v476 = vld [vmem:[%s81 + $0x118] sm:$0xff]
    %v477 = vld [vmem:[%s81 + $0x120] sm:$0x1]
    %v478 = vperm.slane %v477, 0
    %479 = vmatpush.msra.mxu0 %v476
    %480 = vmatpush.msra.mxu0 %v475
    %481 = vmatpush.msra.mxu0 %v474
    %482 = vmatpush.msra.mxu0 %v473
    %483 = vmatpush.msra.mxu0 %v472
    %484 = vmatpush.msra.mxu0 %v471
    %485 = vmatpush.msra.mxu0 %v470
    %486 = vmatpush.msra.mxu0 %v469
    %487 = vmatpush.msra.mxu0 %v468
    %488 = vmatpush.msra.mxu0 %v467
    %489 = vmatpush.msra.mxu0 %v466
    %490 = vmatpush.msra.mxu0 %v465
    %491 = vmatpush.msra.mxu0 %v464
    %492 = vmatpush.msra.mxu0 %v463
    %493 = vmatpush.msra.mxu0 %v462
    %494 = vmatpush.msra.mxu0 %v461
    %495 = vmatmul.f32.gmra.mxu0 %v460
    %v496 = vpop.f32.mrf.mxu0
    %v497 = vadd.f32 %v478, %v496
    %498 = vdwg.mxu0
    %v499 = vmax.f32 %v497, 0.0
    %v500 = vld [vmem:[%s81 + $0x128] sm:$0xff]
    %v501 = vld [vmem:[%s81 + $0x130] sm:$0xff]
    %v502 = vld [vmem:[%s81 + $0x138] sm:$0xff]
    %v503 = vld [vmem:[%s81 + $0x140] sm:$0xff]
    %v504 = vld [vmem:[%s81 + $0x148] sm:$0xff]
    %v505 = vld [vmem:[%s81 + $0x150] sm:$0xff]
    %v506 = vld [vmem:[%s81 + $0x158] sm:$0xff]
    %v507 = vld [vmem:[%s81 + $0x160] sm:$0xff]
    %v508 = vld [vmem:[%s81 + $0x168] sm:$0xff]
    %v509 = vld [vmem:[%s81 + $0x170] sm:$0xff]
    %v510 = vld [vmem:[%s81 + $0x178] sm:$0xff]
    %v511 = vld [vmem:[%s81 + $0x180] sm:$0xff]
    %v512 = vld [vmem:[%s81 + $0x188] sm:$0xff]
    %v513 = vld [vmem:[%s81 + $0x190] sm:$0xff]
    %v514 = vld [vmem:[%s81 + $0x198] sm:$0xff]
    %v515 = vld [vmem:[%s81 + $0x1a0] sm:$0xff]
    %v516 = vld [vmem:[%s81 + $0x1a8] sm:$0x1]
    %v517 = vperm.slane %v516, 0
    %518 = vmatpush.msra.mxu0 %v515
    %519 = vmatpush.msra.mxu0 %v514
    %520 = vmatpush.msra.mxu0 %v513
    %521 = vmatpush.msra.mxu0 %v512
    %522 = vmatpush.msra.mxu0 %v511
    %523 = vmatpush.msra.mxu0 %v510
    %524 = vmatpush.msra.mxu0 %v509
    %525 = vmatpush.msra.mxu0 %v508
    %526 = vmatpush.msra.mxu0 %v507
    %527 = vmatpush.msra.mxu0 %v506
    %528 = vmatpush.msra.mxu0 %v505
    %529 = vmatpush.msra.mxu0 %v504
    %530 = vmatpush.msra.mxu0 %v503
    %531 = vmatpush.msra.mxu0 %v502
    %532 = vmatpush.msra.mxu0 %v501
    %533 = vmatpush.msra.mxu0 %v500
    %534 = vmatmul.f32.gmra.mxu0 %v499
    %v535 = vpop.f32.mrf.mxu0
    %v536 = vadd.f32 %v517, %v535
    %537 = vdwg.mxu0
    %v538 = vmax.f32 %v536, 0.0
    %s539 = scalar_lea.vmem %s2, 128
    %v540 = vld [vmem:[%s539] sm:$0xff]
    %v541 = vld [vmem:[%s539 + $0x8] sm:$0xff]
    %v542 = vld [vmem:[%s539 + $0x10] sm:$0xff]
    %v543 = vld [vmem:[%s539 + $0x18] sm:$0xff]
    %v544 = vld [vmem:[%s539 + $0x20] sm:$0xff]
    %v545 = vld [vmem:[%s539 + $0x28] sm:$0xff]
    %v546 = vld [vmem:[%s539 + $0x30] sm:$0xff]
    %v547 = vld [vmem:[%s539 + $0x38] sm:$0xff]
    %v548 = vld [vmem:[%s539 + $0x40] sm:$0xff]
    %v549 = vld [vmem:[%s539 + $0x48] sm:$0xff]
    %v550 = vld [vmem:[%s539 + $0x50] sm:$0xff]
    %v551 = vld [vmem:[%s539 + $0x58] sm:$0xff]
    %v552 = vld [vmem:[%s539 + $0x60] sm:$0xff]
    %v553 = vld [vmem:[%s539 + $0x68] sm:$0xff]
    %v554 = vld [vmem:[%s539 + $0x70] sm:$0xff]
    %v555 = vld [vmem:[%s539 + $0x78] sm:$0xff]
    %s556 = scalar_lea.vmem [#allocation7], 1
    %v557 = vld [vmem:[%s556] sm:$0x1]
    %v559 = vperm.slane %v557, 0
    %561 = vmatpush.msra.mxu0 %v555
    %562 = vmatpush.msra.mxu0 %v554
    %563 = vmatpush.msra.mxu0 %v553
    %564 = vmatpush.msra.mxu0 %v552
    %565 = vmatpush.msra.mxu0 %v551
    %566 = vmatpush.msra.mxu0 %v550
    %567 = vmatpush.msra.mxu0 %v549
    %568 = vmatpush.msra.mxu0 %v548
    %569 = vmatpush.msra.mxu0 %v547
    %570 = vmatpush.msra.mxu0 %v546
    %571 = vmatpush.msra.mxu0 %v545
    %572 = vmatpush.msra.mxu0 %v544
    %573 = vmatpush.msra.mxu0 %v543
    %574 = vmatpush.msra.mxu0 %v542
    %575 = vmatpush.msra.mxu0 %v541
    %576 = vmatpush.msra.mxu0 %v540
    %577 = vmatmul.f32.gmra.mxu0 %v538
    %v578 = vpop.f32.mrf.mxu0
    %v579 = vadd.f32 %v559, %v578
    %580 = vdwg.mxu0
    %s581 = scalar_lea.vmem %s3, 128
    %v582 = vld [vmem:[%s581] sm:$0xff]
    %v583 = vld [vmem:[%s581 + $0x8] sm:$0xff]
    %v584 = vld [vmem:[%s581 + $0x10] sm:$0xff]
    %v585 = vld [vmem:[%s581 + $0x18] sm:$0xff]
    %v586 = vld [vmem:[%s581 + $0x20] sm:$0xff]
    %v587 = vld [vmem:[%s581 + $0x28] sm:$0xff]
    %v588 = vld [vmem:[%s581 + $0x30] sm:$0xff]
    %v589 = vld [vmem:[%s581 + $0x38] sm:$0xff]
    %v590 = vld [vmem:[%s581 + $0x40] sm:$0xff]
    %v591 = vld [vmem:[%s581 + $0x48] sm:$0xff]
    %v592 = vld [vmem:[%s581 + $0x50] sm:$0xff]
    %v593 = vld [vmem:[%s581 + $0x58] sm:$0xff]
    %v594 = vld [vmem:[%s581 + $0x60] sm:$0xff]
    %v595 = vld [vmem:[%s581 + $0x68] sm:$0xff]
    %v596 = vld [vmem:[%s581 + $0x70] sm:$0xff]
    %v597 = vld [vmem:[%s581 + $0x78] sm:$0xff]
    %s598 = scalar_lea.vmem [#allocation9], 1
    %v599 = vld [vmem:[%s598] sm:$0x1]
    %v601 = vperm.slane %v599, 0
    %603 = vmatpush.msra.mxu0 %v597
    %604 = vmatpush.msra.mxu0 %v596
    %605 = vmatpush.msra.mxu0 %v595
    %606 = vmatpush.msra.mxu0 %v594
    %607 = vmatpush.msra.mxu0 %v593
    %608 = vmatpush.msra.mxu0 %v592
    %609 = vmatpush.msra.mxu0 %v591
    %610 = vmatpush.msra.mxu0 %v590
    %611 = vmatpush.msra.mxu0 %v589
    %612 = vmatpush.msra.mxu0 %v588
    %613 = vmatpush.msra.mxu0 %v587
    %614 = vmatpush.msra.mxu0 %v586
    %615 = vmatpush.msra.mxu0 %v585
    %616 = vmatpush.msra.mxu0 %v584
    %617 = vmatpush.msra.mxu0 %v583
    %618 = vmatpush.msra.mxu0 %v582
    %619 = vmatmul.f32.gmra.mxu0 %v538
    %v620 = vpop.f32.mrf.mxu0
    %v621 = vadd.f32 %v601, %v620
    %622 = vdwg.mxu0
    %v623 = vsub.f32 %v390, %v579
    %v624 = vadd.f32 %v391, %v621
    %s625 = sshll.u32 %s161, 4
    %626 = dma.done %s98, %s625
    %v627 = vld [vmem:[%s97] sm:$0xff]
    %v628 = vld [vmem:[%s97 + $0x8] sm:$0xff]
    %v629 = vld [vmem:[%s97 + $0x10] sm:$0x1]
    %v630 = vperm.slane %v629, 0
    %v632 = vsel %vm168, %v623, 0
    %634 = vmatpush.msra.mxu0 0.0
    %635 = vmatpush.msra.mxu0 0.0
    %636 = vmatpush.msra.mxu0 0.0
    %637 = vmatpush.msra.mxu0 0.0
    %638 = vmatpush.msra.mxu0 0.0
    %639 = vmatpush.msra.mxu0 0.0
    %640 = vmatpush.msra.mxu0 0.0
    %641 = vmatpush.msra.mxu0 0.0
    %642 = vmatpush.msra.mxu0 0.0
    %643 = vmatpush.msra.mxu0 0.0
    %644 = vmatpush.msra.mxu0 0.0
    %645 = vmatpush.msra.mxu0 0.0
    %646 = vmatpush.msra.mxu0 0.0
    %647 = vmatpush.msra.mxu0 0.0
    %648 = vmatpush.msra.mxu0 %v628
    %649 = vmatpush.msra.mxu0 %v627
    %650 = vmatmul.f32.gmra.mxu0 %v632
    %v651 = vpop.f32.mrf.mxu0
    %v652 = vadd.f32 %v630, %v651
    %653 = vdwg.mxu0
    %v654 = vmax.f32 %v652, 0.0
    %v655 = vld [vmem:[%s97 + $0x18] sm:$0xff]
    %v656 = vld [vmem:[%s97 + $0x20] sm:$0xff]
    %v657 = vld [vmem:[%s97 + $0x28] sm:$0xff]
    %v658 = vld [vmem:[%s97 + $0x30] sm:$0xff]
    %v659 = vld [vmem:[%s97 + $0x38] sm:$0xff]
    %v660 = vld [vmem:[%s97 + $0x40] sm:$0xff]
    %v661 = vld [vmem:[%s97 + $0x48] sm:$0xff]
    %v662 = vld [vmem:[%s97 + $0x50] sm:$0xff]
    %v663 = vld [vmem:[%s97 + $0x58] sm:$0xff]
    %v664 = vld [vmem:[%s97 + $0x60] sm:$0xff]
    %v665 = vld [vmem:[%s97 + $0x68] sm:$0xff]
    %v666 = vld [vmem:[%s97 + $0x70] sm:$0xff]
    %v667 = vld [vmem:[%s97 + $0x78] sm:$0xff]
    %v668 = vld [vmem:[%s97 + $0x80] sm:$0xff]
    %v669 = vld [vmem:[%s97 + $0x88] sm:$0xff]
    %v670 = vld [vmem:[%s97 + $0x90] sm:$0xff]
    %v671 = vld [vmem:[%s97 + $0x98] sm:$0x1]
    %v672 = vperm.slane %v671, 0
    %673 = vmatpush.msra.mxu0 %v670
    %674 = vmatpush.msra.mxu0 %v669
    %675 = vmatpush.msra.mxu0 %v668
    %676 = vmatpush.msra.mxu0 %v667
    %677 = vmatpush.msra.mxu0 %v666
    %678 = vmatpush.msra.mxu0 %v665
    %679 = vmatpush.msra.mxu0 %v664
    %680 = vmatpush.msra.mxu0 %v663
    %681 = vmatpush.msra.mxu0 %v662
    %682 = vmatpush.msra.mxu0 %v661
    %683 = vmatpush.msra.mxu0 %v660
    %684 = vmatpush.msra.mxu0 %v659
    %685 = vmatpush.msra.mxu0 %v658
    %686 = vmatpush.msra.mxu0 %v657
    %687 = vmatpush.msra.mxu0 %v656
    %688 = vmatpush.msra.mxu0 %v655
    %689 = vmatmul.f32.gmra.mxu0 %v654
    %v690 = vpop.f32.mrf.mxu0
    %v691 = vadd.f32 %v672, %v690
    %692 = vdwg.mxu0
    %v693 = vmax.f32 %v691, 0.0
    %v694 = vld [vmem:[%s97 + $0xa0] sm:$0xff]
    %v695 = vld [vmem:[%s97 + $0xa8] sm:$0xff]
    %v696 = vld [vmem:[%s97 + $0xb0] sm:$0xff]
    %v697 = vld [vmem:[%s97 + $0xb8] sm:$0xff]
    %v698 = vld [vmem:[%s97 + $0xc0] sm:$0xff]
    %v699 = vld [vmem:[%s97 + $0xc8] sm:$0xff]
    %v700 = vld [vmem:[%s97 + $0xd0] sm:$0xff]
    %v701 = vld [vmem:[%s97 + $0xd8] sm:$0xff]
    %v702 = vld [vmem:[%s97 + $0xe0] sm:$0xff]
    %v703 = vld [vmem:[%s97 + $0xe8] sm:$0xff]
    %v704 = vld [vmem:[%s97 + $0xf0] sm:$0xff]
    %v705 = vld [vmem:[%s97 + $0xf8] sm:$0xff]
    %v706 = vld [vmem:[%s97 + $0x100] sm:$0xff]
    %v707 = vld [vmem:[%s97 + $0x108] sm:$0xff]
    %v708 = vld [vmem:[%s97 + $0x110] sm:$0xff]
    %v709 = vld [vmem:[%s97 + $0x118] sm:$0xff]
    %v710 = vld [vmem:[%s97 + $0x120] sm:$0x1]
    %v711 = vperm.slane %v710, 0
    %712 = vmatpush.msra.mxu0 %v709
    %713 = vmatpush.msra.mxu0 %v708
    %714 = vmatpush.msra.mxu0 %v707
    %715 = vmatpush.msra.mxu0 %v706
    %716 = vmatpush.msra.mxu0 %v705
    %717 = vmatpush.msra.mxu0 %v704
    %718 = vmatpush.msra.mxu0 %v703
    %719 = vmatpush.msra.mxu0 %v702
    %720 = vmatpush.msra.mxu0 %v701
    %721 = vmatpush.msra.mxu0 %v700
    %722 = vmatpush.msra.mxu0 %v699
    %723 = vmatpush.msra.mxu0 %v698
    %724 = vmatpush.msra.mxu0 %v697
    %725 = vmatpush.msra.mxu0 %v696
    %726 = vmatpush.msra.mxu0 %v695
    %727 = vmatpush.msra.mxu0 %v694
    %728 = vmatmul.f32.gmra.mxu0 %v693
    %v729 = vpop.f32.mrf.mxu0
    %v730 = vadd.f32 %v711, %v729
    %731 = vdwg.mxu0
    %v732 = vmax.f32 %v730, 0.0
    %v733 = vld [vmem:[%s97 + $0x128] sm:$0xff]
    %v734 = vld [vmem:[%s97 + $0x130] sm:$0xff]
    %v735 = vld [vmem:[%s97 + $0x138] sm:$0xff]
    %v736 = vld [vmem:[%s97 + $0x140] sm:$0xff]
    %v737 = vld [vmem:[%s97 + $0x148] sm:$0xff]
    %v738 = vld [vmem:[%s97 + $0x150] sm:$0xff]
    %v739 = vld [vmem:[%s97 + $0x158] sm:$0xff]
    %v740 = vld [vmem:[%s97 + $0x160] sm:$0xff]
    %v741 = vld [vmem:[%s97 + $0x168] sm:$0xff]
    %v742 = vld [vmem:[%s97 + $0x170] sm:$0xff]
    %v743 = vld [vmem:[%s97 + $0x178] sm:$0xff]
    %v744 = vld [vmem:[%s97 + $0x180] sm:$0xff]
    %v745 = vld [vmem:[%s97 + $0x188] sm:$0xff]
    %v746 = vld [vmem:[%s97 + $0x190] sm:$0xff]
    %v747 = vld [vmem:[%s97 + $0x198] sm:$0xff]
    %v748 = vld [vmem:[%s97 + $0x1a0] sm:$0xff]
    %v749 = vld [vmem:[%s97 + $0x1a8] sm:$0x1]
    %v750 = vperm.slane %v749, 0
    %751 = vmatpush.msra.mxu0 %v748
    %752 = vmatpush.msra.mxu0 %v747
    %753 = vmatpush.msra.mxu0 %v746
    %754 = vmatpush.msra.mxu0 %v745
    %755 = vmatpush.msra.mxu0 %v744
    %756 = vmatpush.msra.mxu0 %v743
    %757 = vmatpush.msra.mxu0 %v742
    %758 = vmatpush.msra.mxu0 %v741
    %759 = vmatpush.msra.mxu0 %v740
    %760 = vmatpush.msra.mxu0 %v739
    %761 = vmatpush.msra.mxu0 %v738
    %762 = vmatpush.msra.mxu0 %v737
    %763 = vmatpush.msra.mxu0 %v736
    %764 = vmatpush.msra.mxu0 %v735
    %765 = vmatpush.msra.mxu0 %v734
    %766 = vmatpush.msra.mxu0 %v733
    %767 = vmatmul.f32.gmra.mxu0 %v732
    %v768 = vpop.f32.mrf.mxu0
    %v769 = vadd.f32 %v750, %v768
    %770 = vdwg.mxu0
    %v771 = vmax.f32 %v769, 0.0
    %s772 = scalar_lea.vmem %s2, 256
    %v773 = vld [vmem:[%s772] sm:$0xff]
    %v774 = vld [vmem:[%s772 + $0x8] sm:$0xff]
    %v775 = vld [vmem:[%s772 + $0x10] sm:$0xff]
    %v776 = vld [vmem:[%s772 + $0x18] sm:$0xff]
    %v777 = vld [vmem:[%s772 + $0x20] sm:$0xff]
    %v778 = vld [vmem:[%s772 + $0x28] sm:$0xff]
    %v779 = vld [vmem:[%s772 + $0x30] sm:$0xff]
    %v780 = vld [vmem:[%s772 + $0x38] sm:$0xff]
    %v781 = vld [vmem:[%s772 + $0x40] sm:$0xff]
    %v782 = vld [vmem:[%s772 + $0x48] sm:$0xff]
    %v783 = vld [vmem:[%s772 + $0x50] sm:$0xff]
    %v784 = vld [vmem:[%s772 + $0x58] sm:$0xff]
    %v785 = vld [vmem:[%s772 + $0x60] sm:$0xff]
    %v786 = vld [vmem:[%s772 + $0x68] sm:$0xff]
    %v787 = vld [vmem:[%s772 + $0x70] sm:$0xff]
    %v788 = vld [vmem:[%s772 + $0x78] sm:$0xff]
    %s789 = scalar_lea.vmem [#allocation7], 2
    %v790 = vld [vmem:[%s789] sm:$0x1]
    %v792 = vperm.slane %v790, 0
    %794 = vmatpush.msra.mxu0 %v788
    %795 = vmatpush.msra.mxu0 %v787
    %796 = vmatpush.msra.mxu0 %v786
    %797 = vmatpush.msra.mxu0 %v785
    %798 = vmatpush.msra.mxu0 %v784
    %799 = vmatpush.msra.mxu0 %v783
    %800 = vmatpush.msra.mxu0 %v782
    %801 = vmatpush.msra.mxu0 %v781
    %802 = vmatpush.msra.mxu0 %v780
    %803 = vmatpush.msra.mxu0 %v779
    %804 = vmatpush.msra.mxu0 %v778
    %805 = vmatpush.msra.mxu0 %v777
    %806 = vmatpush.msra.mxu0 %v776
    %807 = vmatpush.msra.mxu0 %v775
    %808 = vmatpush.msra.mxu0 %v774
    %809 = vmatpush.msra.mxu0 %v773
    %810 = vmatmul.f32.gmra.mxu0 %v771
    %v811 = vpop.f32.mrf.mxu0
    %v812 = vadd.f32 %v792, %v811
    %813 = vdwg.mxu0
    %s814 = scalar_lea.vmem %s3, 256
    %v815 = vld [vmem:[%s814] sm:$0xff]
    %v816 = vld [vmem:[%s814 + $0x8] sm:$0xff]
    %v817 = vld [vmem:[%s814 + $0x10] sm:$0xff]
    %v818 = vld [vmem:[%s814 + $0x18] sm:$0xff]
    %v819 = vld [vmem:[%s814 + $0x20] sm:$0xff]
    %v820 = vld [vmem:[%s814 + $0x28] sm:$0xff]
    %v821 = vld [vmem:[%s814 + $0x30] sm:$0xff]
    %v822 = vld [vmem:[%s814 + $0x38] sm:$0xff]
    %v823 = vld [vmem:[%s814 + $0x40] sm:$0xff]
    %v824 = vld [vmem:[%s814 + $0x48] sm:$0xff]
    %v825 = vld [vmem:[%s814 + $0x50] sm:$0xff]
    %v826 = vld [vmem:[%s814 + $0x58] sm:$0xff]
    %v827 = vld [vmem:[%s814 + $0x60] sm:$0xff]
    %v828 = vld [vmem:[%s814 + $0x68] sm:$0xff]
    %v829 = vld [vmem:[%s814 + $0x70] sm:$0xff]
    %v830 = vld [vmem:[%s814 + $0x78] sm:$0xff]
    %s831 = scalar_lea.vmem [#allocation9], 2
    %v832 = vld [vmem:[%s831] sm:$0x1]
    %v834 = vperm.slane %v832, 0
    %836 = vmatpush.msra.mxu0 %v830
    %837 = vmatpush.msra.mxu0 %v829
    %838 = vmatpush.msra.mxu0 %v828
    %839 = vmatpush.msra.mxu0 %v827
    %840 = vmatpush.msra.mxu0 %v826
    %841 = vmatpush.msra.mxu0 %v825
    %842 = vmatpush.msra.mxu0 %v824
    %843 = vmatpush.msra.mxu0 %v823
    %844 = vmatpush.msra.mxu0 %v822
    %845 = vmatpush.msra.mxu0 %v821
    %846 = vmatpush.msra.mxu0 %v820
    %847 = vmatpush.msra.mxu0 %v819
    %848 = vmatpush.msra.mxu0 %v818
    %849 = vmatpush.msra.mxu0 %v817
    %850 = vmatpush.msra.mxu0 %v816
    %851 = vmatpush.msra.mxu0 %v815
    %852 = vmatmul.f32.gmra.mxu0 %v771
    %v853 = vpop.f32.mrf.mxu0
    %v854 = vadd.f32 %v834, %v853
    %855 = vdwg.mxu0
    %v856 = vsub.f32 %v623, %v812
    %v857 = vadd.f32 %v624, %v854
    %s858 = sshll.u32 %s161, 4
    %859 = dma.done %s114, %s858
    %v860 = vld [vmem:[%s113] sm:$0xff]
    %v861 = vld [vmem:[%s113 + $0x8] sm:$0xff]
    %v862 = vld [vmem:[%s113 + $0x10] sm:$0x1]
    %v863 = vperm.slane %v862, 0
    %v865 = vsel %vm168, %v856, 0
    %867 = vmatpush.msra.mxu0 0.0
    %868 = vmatpush.msra.mxu0 0.0
    %869 = vmatpush.msra.mxu0 0.0
    %870 = vmatpush.msra.mxu0 0.0
    %871 = vmatpush.msra.mxu0 0.0
    %872 = vmatpush.msra.mxu0 0.0
    %873 = vmatpush.msra.mxu0 0.0
    %874 = vmatpush.msra.mxu0 0.0
    %875 = vmatpush.msra.mxu0 0.0
    %876 = vmatpush.msra.mxu0 0.0
    %877 = vmatpush.msra.mxu0 0.0
    %878 = vmatpush.msra.mxu0 0.0
    %879 = vmatpush.msra.mxu0 0.0
    %880 = vmatpush.msra.mxu0 0.0
    %881 = vmatpush.msra.mxu0 %v861
    %882 = vmatpush.msra.mxu0 %v860
    %883 = vmatmul.f32.gmra.mxu0 %v865
    %v884 = vpop.f32.mrf.mxu0
    %v885 = vadd.f32 %v863, %v884
    %886 = vdwg.mxu0
    %v887 = vmax.f32 %v885, 0.0
    %v888 = vld [vmem:[%s113 + $0x18] sm:$0xff]
    %v889 = vld [vmem:[%s113 + $0x20] sm:$0xff]
    %v890 = vld [vmem:[%s113 + $0x28] sm:$0xff]
    %v891 = vld [vmem:[%s113 + $0x30] sm:$0xff]
    %v892 = vld [vmem:[%s113 + $0x38] sm:$0xff]
    %v893 = vld [vmem:[%s113 + $0x40] sm:$0xff]
    %v894 = vld [vmem:[%s113 + $0x48] sm:$0xff]
    %v895 = vld [vmem:[%s113 + $0x50] sm:$0xff]
    %v896 = vld [vmem:[%s113 + $0x58] sm:$0xff]
    %v897 = vld [vmem:[%s113 + $0x60] sm:$0xff]
    %v898 = vld [vmem:[%s113 + $0x68] sm:$0xff]
    %v899 = vld [vmem:[%s113 + $0x70] sm:$0xff]
    %v900 = vld [vmem:[%s113 + $0x78] sm:$0xff]
    %v901 = vld [vmem:[%s113 + $0x80] sm:$0xff]
    %v902 = vld [vmem:[%s113 + $0x88] sm:$0xff]
    %v903 = vld [vmem:[%s113 + $0x90] sm:$0xff]
    %v904 = vld [vmem:[%s113 + $0x98] sm:$0x1]
    %v905 = vperm.slane %v904, 0
    %906 = vmatpush.msra.mxu0 %v903
    %907 = vmatpush.msra.mxu0 %v902
    %908 = vmatpush.msra.mxu0 %v901
    %909 = vmatpush.msra.mxu0 %v900
    %910 = vmatpush.msra.mxu0 %v899
    %911 = vmatpush.msra.mxu0 %v898
    %912 = vmatpush.msra.mxu0 %v897
    %913 = vmatpush.msra.mxu0 %v896
    %914 = vmatpush.msra.mxu0 %v895
    %915 = vmatpush.msra.mxu0 %v894
    %916 = vmatpush.msra.mxu0 %v893
    %917 = vmatpush.msra.mxu0 %v892
    %918 = vmatpush.msra.mxu0 %v891
    %919 = vmatpush.msra.mxu0 %v890
    %920 = vmatpush.msra.mxu0 %v889
    %921 = vmatpush.msra.mxu0 %v888
    %922 = vmatmul.f32.gmra.mxu0 %v887
    %v923 = vpop.f32.mrf.mxu0
    %v924 = vadd.f32 %v905, %v923
    %925 = vdwg.mxu0
    %v926 = vmax.f32 %v924, 0.0
    %v927 = vld [vmem:[%s113 + $0xa0] sm:$0xff]
    %v928 = vld [vmem:[%s113 + $0xa8] sm:$0xff]
    %v929 = vld [vmem:[%s113 + $0xb0] sm:$0xff]
    %v930 = vld [vmem:[%s113 + $0xb8] sm:$0xff]
    %v931 = vld [vmem:[%s113 + $0xc0] sm:$0xff]
    %v932 = vld [vmem:[%s113 + $0xc8] sm:$0xff]
    %v933 = vld [vmem:[%s113 + $0xd0] sm:$0xff]
    %v934 = vld [vmem:[%s113 + $0xd8] sm:$0xff]
    %v935 = vld [vmem:[%s113 + $0xe0] sm:$0xff]
    %v936 = vld [vmem:[%s113 + $0xe8] sm:$0xff]
    %v937 = vld [vmem:[%s113 + $0xf0] sm:$0xff]
    %v938 = vld [vmem:[%s113 + $0xf8] sm:$0xff]
    %v939 = vld [vmem:[%s113 + $0x100] sm:$0xff]
    %v940 = vld [vmem:[%s113 + $0x108] sm:$0xff]
    %v941 = vld [vmem:[%s113 + $0x110] sm:$0xff]
    %v942 = vld [vmem:[%s113 + $0x118] sm:$0xff]
    %v943 = vld [vmem:[%s113 + $0x120] sm:$0x1]
    %v944 = vperm.slane %v943, 0
    %945 = vmatpush.msra.mxu0 %v942
    %946 = vmatpush.msra.mxu0 %v941
    %947 = vmatpush.msra.mxu0 %v940
    %948 = vmatpush.msra.mxu0 %v939
    %949 = vmatpush.msra.mxu0 %v938
    %950 = vmatpush.msra.mxu0 %v937
    %951 = vmatpush.msra.mxu0 %v936
    %952 = vmatpush.msra.mxu0 %v935
    %953 = vmatpush.msra.mxu0 %v934
    %954 = vmatpush.msra.mxu0 %v933
    %955 = vmatpush.msra.mxu0 %v932
    %956 = vmatpush.msra.mxu0 %v931
    %957 = vmatpush.msra.mxu0 %v930
    %958 = vmatpush.msra.mxu0 %v929
    %959 = vmatpush.msra.mxu0 %v928
    %960 = vmatpush.msra.mxu0 %v927
    %961 = vmatmul.f32.gmra.mxu0 %v926
    %v962 = vpop.f32.mrf.mxu0
    %v963 = vadd.f32 %v944, %v962
    %964 = vdwg.mxu0
    %v965 = vmax.f32 %v963, 0.0
    %v966 = vld [vmem:[%s113 + $0x128] sm:$0xff]
    %v967 = vld [vmem:[%s113 + $0x130] sm:$0xff]
    %v968 = vld [vmem:[%s113 + $0x138] sm:$0xff]
    %v969 = vld [vmem:[%s113 + $0x140] sm:$0xff]
    %v970 = vld [vmem:[%s113 + $0x148] sm:$0xff]
    %v971 = vld [vmem:[%s113 + $0x150] sm:$0xff]
    %v972 = vld [vmem:[%s113 + $0x158] sm:$0xff]
    %v973 = vld [vmem:[%s113 + $0x160] sm:$0xff]
    %v974 = vld [vmem:[%s113 + $0x168] sm:$0xff]
    %v975 = vld [vmem:[%s113 + $0x170] sm:$0xff]
    %v976 = vld [vmem:[%s113 + $0x178] sm:$0xff]
    %v977 = vld [vmem:[%s113 + $0x180] sm:$0xff]
    %v978 = vld [vmem:[%s113 + $0x188] sm:$0xff]
    %v979 = vld [vmem:[%s113 + $0x190] sm:$0xff]
    %v980 = vld [vmem:[%s113 + $0x198] sm:$0xff]
    %v981 = vld [vmem:[%s113 + $0x1a0] sm:$0xff]
    %v982 = vld [vmem:[%s113 + $0x1a8] sm:$0x1]
    %v983 = vperm.slane %v982, 0
    %984 = vmatpush.msra.mxu0 %v981
    %985 = vmatpush.msra.mxu0 %v980
    %986 = vmatpush.msra.mxu0 %v979
    %987 = vmatpush.msra.mxu0 %v978
    %988 = vmatpush.msra.mxu0 %v977
    %989 = vmatpush.msra.mxu0 %v976
    %990 = vmatpush.msra.mxu0 %v975
    %991 = vmatpush.msra.mxu0 %v974
    %992 = vmatpush.msra.mxu0 %v973
    %993 = vmatpush.msra.mxu0 %v972
    %994 = vmatpush.msra.mxu0 %v971
    %995 = vmatpush.msra.mxu0 %v970
    %996 = vmatpush.msra.mxu0 %v969
    %997 = vmatpush.msra.mxu0 %v968
    %998 = vmatpush.msra.mxu0 %v967
    %999 = vmatpush.msra.mxu0 %v966
    %1000 = vmatmul.f32.gmra.mxu0 %v965
    %v1001 = vpop.f32.mrf.mxu0
    %v1002 = vadd.f32 %v983, %v1001
    %1003 = vdwg.mxu0
    %v1004 = vmax.f32 %v1002, 0.0
    %s1005 = scalar_lea.vmem %s2, 384
    %v1006 = vld [vmem:[%s1005] sm:$0xff]
    %v1007 = vld [vmem:[%s1005 + $0x8] sm:$0xff]
    %v1008 = vld [vmem:[%s1005 + $0x10] sm:$0xff]
    %v1009 = vld [vmem:[%s1005 + $0x18] sm:$0xff]
    %v1010 = vld [vmem:[%s1005 + $0x20] sm:$0xff]
    %v1011 = vld [vmem:[%s1005 + $0x28] sm:$0xff]
    %v1012 = vld [vmem:[%s1005 + $0x30] sm:$0xff]
    %v1013 = vld [vmem:[%s1005 + $0x38] sm:$0xff]
    %v1014 = vld [vmem:[%s1005 + $0x40] sm:$0xff]
    %v1015 = vld [vmem:[%s1005 + $0x48] sm:$0xff]
    %v1016 = vld [vmem:[%s1005 + $0x50] sm:$0xff]
    %v1017 = vld [vmem:[%s1005 + $0x58] sm:$0xff]
    %v1018 = vld [vmem:[%s1005 + $0x60] sm:$0xff]
    %v1019 = vld [vmem:[%s1005 + $0x68] sm:$0xff]
    %v1020 = vld [vmem:[%s1005 + $0x70] sm:$0xff]
    %v1021 = vld [vmem:[%s1005 + $0x78] sm:$0xff]
    %s1022 = scalar_lea.vmem [#allocation7], 3
    %v1023 = vld [vmem:[%s1022] sm:$0x1]
    %v1025 = vperm.slane %v1023, 0
    %1027 = vmatpush.msra.mxu0 %v1021
    %1028 = vmatpush.msra.mxu0 %v1020
    %1029 = vmatpush.msra.mxu0 %v1019
    %1030 = vmatpush.msra.mxu0 %v1018
    %1031 = vmatpush.msra.mxu0 %v1017
    %1032 = vmatpush.msra.mxu0 %v1016
    %1033 = vmatpush.msra.mxu0 %v1015
    %1034 = vmatpush.msra.mxu0 %v1014
    %1035 = vmatpush.msra.mxu0 %v1013
    %1036 = vmatpush.msra.mxu0 %v1012
    %1037 = vmatpush.msra.mxu0 %v1011
    %1038 = vmatpush.msra.mxu0 %v1010
    %1039 = vmatpush.msra.mxu0 %v1009
    %1040 = vmatpush.msra.mxu0 %v1008
    %1041 = vmatpush.msra.mxu0 %v1007
    %1042 = vmatpush.msra.mxu0 %v1006
    %1043 = vmatmul.f32.gmra.mxu0 %v1004
    %v1044 = vpop.f32.mrf.mxu0
    %v1045 = vadd.f32 %v1025, %v1044
    %1046 = vdwg.mxu0
    %s1047 = scalar_lea.vmem %s3, 384
    %v1048 = vld [vmem:[%s1047] sm:$0xff]
    %v1049 = vld [vmem:[%s1047 + $0x8] sm:$0xff]
    %v1050 = vld [vmem:[%s1047 + $0x10] sm:$0xff]
    %v1051 = vld [vmem:[%s1047 + $0x18] sm:$0xff]
    %v1052 = vld [vmem:[%s1047 + $0x20] sm:$0xff]
    %v1053 = vld [vmem:[%s1047 + $0x28] sm:$0xff]
    %v1054 = vld [vmem:[%s1047 + $0x30] sm:$0xff]
    %v1055 = vld [vmem:[%s1047 + $0x38] sm:$0xff]
    %v1056 = vld [vmem:[%s1047 + $0x40] sm:$0xff]
    %v1057 = vld [vmem:[%s1047 + $0x48] sm:$0xff]
    %v1058 = vld [vmem:[%s1047 + $0x50] sm:$0xff]
    %v1059 = vld [vmem:[%s1047 + $0x58] sm:$0xff]
    %v1060 = vld [vmem:[%s1047 + $0x60] sm:$0xff]
    %v1061 = vld [vmem:[%s1047 + $0x68] sm:$0xff]
    %v1062 = vld [vmem:[%s1047 + $0x70] sm:$0xff]
    %v1063 = vld [vmem:[%s1047 + $0x78] sm:$0xff]
    %s1064 = scalar_lea.vmem [#allocation9], 3
    %v1065 = vld [vmem:[%s1064] sm:$0x1]
    %v1067 = vperm.slane %v1065, 0
    %1069 = vmatpush.msra.mxu0 %v1063
    %1070 = vmatpush.msra.mxu0 %v1062
    %1071 = vmatpush.msra.mxu0 %v1061
    %1072 = vmatpush.msra.mxu0 %v1060
    %1073 = vmatpush.msra.mxu0 %v1059
    %1074 = vmatpush.msra.mxu0 %v1058
    %1075 = vmatpush.msra.mxu0 %v1057
    %1076 = vmatpush.msra.mxu0 %v1056
    %1077 = vmatpush.msra.mxu0 %v1055
    %1078 = vmatpush.msra.mxu0 %v1054
    %1079 = vmatpush.msra.mxu0 %v1053
    %1080 = vmatpush.msra.mxu0 %v1052
    %1081 = vmatpush.msra.mxu0 %v1051
    %1082 = vmatpush.msra.mxu0 %v1050
    %1083 = vmatpush.msra.mxu0 %v1049
    %1084 = vmatpush.msra.mxu0 %v1048
    %1085 = vmatmul.f32.gmra.mxu0 %v1004
    %v1086 = vpop.f32.mrf.mxu0
    %v1087 = vadd.f32 %v1067, %v1086
    %1088 = vdwg.mxu0
    %v1089 = vsub.f32 %v856, %v1045
    %v1090 = vadd.f32 %v857, %v1087
    %s1091 = sshll.u32 %s161, 4
    %1092 = dma.done %s130, %s1091
    %v1093 = vld [vmem:[%s129] sm:$0xff]
    %v1094 = vld [vmem:[%s129 + $0x8] sm:$0xff]
    %v1095 = vld [vmem:[%s129 + $0x10] sm:$0x1]
    %v1096 = vperm.slane %v1095, 0
    %v1098 = vsel %vm168, %v1089, 0
    %1100 = vmatpush.msra.mxu0 0.0
    %1101 = vmatpush.msra.mxu0 0.0
    %1102 = vmatpush.msra.mxu0 0.0
    %1103 = vmatpush.msra.mxu0 0.0
    %1104 = vmatpush.msra.mxu0 0.0
    %1105 = vmatpush.msra.mxu0 0.0
    %1106 = vmatpush.msra.mxu0 0.0
    %1107 = vmatpush.msra.mxu0 0.0
    %1108 = vmatpush.msra.mxu0 0.0
    %1109 = vmatpush.msra.mxu0 0.0
    %1110 = vmatpush.msra.mxu0 0.0
    %1111 = vmatpush.msra.mxu0 0.0
    %1112 = vmatpush.msra.mxu0 0.0
    %1113 = vmatpush.msra.mxu0 0.0
    %1114 = vmatpush.msra.mxu0 %v1094
    %1115 = vmatpush.msra.mxu0 %v1093
    %1116 = vmatmul.f32.gmra.mxu0 %v1098
    %v1117 = vpop.f32.mrf.mxu0
    %v1118 = vadd.f32 %v1096, %v1117
    %1119 = vdwg.mxu0
    %v1120 = vmax.f32 %v1118, 0.0
    %v1121 = vld [vmem:[%s129 + $0x18] sm:$0xff]
    %v1122 = vld [vmem:[%s129 + $0x20] sm:$0xff]
    %v1123 = vld [vmem:[%s129 + $0x28] sm:$0xff]
    %v1124 = vld [vmem:[%s129 + $0x30] sm:$0xff]
    %v1125 = vld [vmem:[%s129 + $0x38] sm:$0xff]
    %v1126 = vld [vmem:[%s129 + $0x40] sm:$0xff]
    %v1127 = vld [vmem:[%s129 + $0x48] sm:$0xff]
    %v1128 = vld [vmem:[%s129 + $0x50] sm:$0xff]
    %v1129 = vld [vmem:[%s129 + $0x58] sm:$0xff]
    %v1130 = vld [vmem:[%s129 + $0x60] sm:$0xff]
    %v1131 = vld [vmem:[%s129 + $0x68] sm:$0xff]
    %v1132 = vld [vmem:[%s129 + $0x70] sm:$0xff]
    %v1133 = vld [vmem:[%s129 + $0x78] sm:$0xff]
    %v1134 = vld [vmem:[%s129 + $0x80] sm:$0xff]
    %v1135 = vld [vmem:[%s129 + $0x88] sm:$0xff]
    %v1136 = vld [vmem:[%s129 + $0x90] sm:$0xff]
    %v1137 = vld [vmem:[%s129 + $0x98] sm:$0x1]
    %v1138 = vperm.slane %v1137, 0
    %1139 = vmatpush.msra.mxu0 %v1136
    %1140 = vmatpush.msra.mxu0 %v1135
    %1141 = vmatpush.msra.mxu0 %v1134
    %1142 = vmatpush.msra.mxu0 %v1133
    %1143 = vmatpush.msra.mxu0 %v1132
    %1144 = vmatpush.msra.mxu0 %v1131
    %1145 = vmatpush.msra.mxu0 %v1130
    %1146 = vmatpush.msra.mxu0 %v1129
    %1147 = vmatpush.msra.mxu0 %v1128
    %1148 = vmatpush.msra.mxu0 %v1127
    %1149 = vmatpush.msra.mxu0 %v1126
    %1150 = vmatpush.msra.mxu0 %v1125
    %1151 = vmatpush.msra.mxu0 %v1124
    %1152 = vmatpush.msra.mxu0 %v1123
    %1153 = vmatpush.msra.mxu0 %v1122
    %1154 = vmatpush.msra.mxu0 %v1121
    %1155 = vmatmul.f32.gmra.mxu0 %v1120
    %v1156 = vpop.f32.mrf.mxu0
    %v1157 = vadd.f32 %v1138, %v1156
    %1158 = vdwg.mxu0
    %v1159 = vmax.f32 %v1157, 0.0
    %v1160 = vld [vmem:[%s129 + $0xa0] sm:$0xff]
    %v1161 = vld [vmem:[%s129 + $0xa8] sm:$0xff]
    %v1162 = vld [vmem:[%s129 + $0xb0] sm:$0xff]
    %v1163 = vld [vmem:[%s129 + $0xb8] sm:$0xff]
    %v1164 = vld [vmem:[%s129 + $0xc0] sm:$0xff]
    %v1165 = vld [vmem:[%s129 + $0xc8] sm:$0xff]
    %v1166 = vld [vmem:[%s129 + $0xd0] sm:$0xff]
    %v1167 = vld [vmem:[%s129 + $0xd8] sm:$0xff]
    %v1168 = vld [vmem:[%s129 + $0xe0] sm:$0xff]
    %v1169 = vld [vmem:[%s129 + $0xe8] sm:$0xff]
    %v1170 = vld [vmem:[%s129 + $0xf0] sm:$0xff]
    %v1171 = vld [vmem:[%s129 + $0xf8] sm:$0xff]
    %v1172 = vld [vmem:[%s129 + $0x100] sm:$0xff]
    %v1173 = vld [vmem:[%s129 + $0x108] sm:$0xff]
    %v1174 = vld [vmem:[%s129 + $0x110] sm:$0xff]
    %v1175 = vld [vmem:[%s129 + $0x118] sm:$0xff]
    %v1176 = vld [vmem:[%s129 + $0x120] sm:$0x1]
    %v1177 = vperm.slane %v1176, 0
    %1178 = vmatpush.msra.mxu0 %v1175
    %1179 = vmatpush.msra.mxu0 %v1174
    %1180 = vmatpush.msra.mxu0 %v1173
    %1181 = vmatpush.msra.mxu0 %v1172
    %1182 = vmatpush.msra.mxu0 %v1171
    %1183 = vmatpush.msra.mxu0 %v1170
    %1184 = vmatpush.msra.mxu0 %v1169
    %1185 = vmatpush.msra.mxu0 %v1168
    %1186 = vmatpush.msra.mxu0 %v1167
    %1187 = vmatpush.msra.mxu0 %v1166
    %1188 = vmatpush.msra.mxu0 %v1165
    %1189 = vmatpush.msra.mxu0 %v1164
    %1190 = vmatpush.msra.mxu0 %v1163
    %1191 = vmatpush.msra.mxu0 %v1162
    %1192 = vmatpush.msra.mxu0 %v1161
    %1193 = vmatpush.msra.mxu0 %v1160
    %1194 = vmatmul.f32.gmra.mxu0 %v1159
    %v1195 = vpop.f32.mrf.mxu0
    %v1196 = vadd.f32 %v1177, %v1195
    %1197 = vdwg.mxu0
    %v1198 = vmax.f32 %v1196, 0.0
    %v1199 = vld [vmem:[%s129 + $0x128] sm:$0xff]
    %v1200 = vld [vmem:[%s129 + $0x130] sm:$0xff]
    %v1201 = vld [vmem:[%s129 + $0x138] sm:$0xff]
    %v1202 = vld [vmem:[%s129 + $0x140] sm:$0xff]
    %v1203 = vld [vmem:[%s129 + $0x148] sm:$0xff]
    %v1204 = vld [vmem:[%s129 + $0x150] sm:$0xff]
    %v1205 = vld [vmem:[%s129 + $0x158] sm:$0xff]
    %v1206 = vld [vmem:[%s129 + $0x160] sm:$0xff]
    %v1207 = vld [vmem:[%s129 + $0x168] sm:$0xff]
    %v1208 = vld [vmem:[%s129 + $0x170] sm:$0xff]
    %v1209 = vld [vmem:[%s129 + $0x178] sm:$0xff]
    %v1210 = vld [vmem:[%s129 + $0x180] sm:$0xff]
    %v1211 = vld [vmem:[%s129 + $0x188] sm:$0xff]
    %v1212 = vld [vmem:[%s129 + $0x190] sm:$0xff]
    %v1213 = vld [vmem:[%s129 + $0x198] sm:$0xff]
    %v1214 = vld [vmem:[%s129 + $0x1a0] sm:$0xff]
    %v1215 = vld [vmem:[%s129 + $0x1a8] sm:$0x1]
    %v1216 = vperm.slane %v1215, 0
    %1217 = vmatpush.msra.mxu0 %v1214
    %1218 = vmatpush.msra.mxu0 %v1213
    %1219 = vmatpush.msra.mxu0 %v1212
    %1220 = vmatpush.msra.mxu0 %v1211
    %1221 = vmatpush.msra.mxu0 %v1210
    %1222 = vmatpush.msra.mxu0 %v1209
    %1223 = vmatpush.msra.mxu0 %v1208
    %1224 = vmatpush.msra.mxu0 %v1207
    %1225 = vmatpush.msra.mxu0 %v1206
    %1226 = vmatpush.msra.mxu0 %v1205
    %1227 = vmatpush.msra.mxu0 %v1204
    %1228 = vmatpush.msra.mxu0 %v1203
    %1229 = vmatpush.msra.mxu0 %v1202
    %1230 = vmatpush.msra.mxu0 %v1201
    %1231 = vmatpush.msra.mxu0 %v1200
    %1232 = vmatpush.msra.mxu0 %v1199
    %1233 = vmatmul.f32.gmra.mxu0 %v1198
    %v1234 = vpop.f32.mrf.mxu0
    %v1235 = vadd.f32 %v1216, %v1234
    %1236 = vdwg.mxu0
    %v1237 = vmax.f32 %v1235, 0.0
    %s1238 = scalar_lea.vmem %s2, 512
    %v1239 = vld [vmem:[%s1238] sm:$0xff]
    %v1240 = vld [vmem:[%s1238 + $0x8] sm:$0xff]
    %v1241 = vld [vmem:[%s1238 + $0x10] sm:$0xff]
    %v1242 = vld [vmem:[%s1238 + $0x18] sm:$0xff]
    %v1243 = vld [vmem:[%s1238 + $0x20] sm:$0xff]
    %v1244 = vld [vmem:[%s1238 + $0x28] sm:$0xff]
    %v1245 = vld [vmem:[%s1238 + $0x30] sm:$0xff]
    %v1246 = vld [vmem:[%s1238 + $0x38] sm:$0xff]
    %v1247 = vld [vmem:[%s1238 + $0x40] sm:$0xff]
    %v1248 = vld [vmem:[%s1238 + $0x48] sm:$0xff]
    %v1249 = vld [vmem:[%s1238 + $0x50] sm:$0xff]
    %v1250 = vld [vmem:[%s1238 + $0x58] sm:$0xff]
    %v1251 = vld [vmem:[%s1238 + $0x60] sm:$0xff]
    %v1252 = vld [vmem:[%s1238 + $0x68] sm:$0xff]
    %v1253 = vld [vmem:[%s1238 + $0x70] sm:$0xff]
    %v1254 = vld [vmem:[%s1238 + $0x78] sm:$0xff]
    %s1255 = scalar_lea.vmem [#allocation7], 4
    %v1256 = vld [vmem:[%s1255] sm:$0x1]
    %v1258 = vperm.slane %v1256, 0
    %1260 = vmatpush.msra.mxu0 %v1254
    %1261 = vmatpush.msra.mxu0 %v1253
    %1262 = vmatpush.msra.mxu0 %v1252
    %1263 = vmatpush.msra.mxu0 %v1251
    %1264 = vmatpush.msra.mxu0 %v1250
    %1265 = vmatpush.msra.mxu0 %v1249
    %1266 = vmatpush.msra.mxu0 %v1248
    %1267 = vmatpush.msra.mxu0 %v1247
    %1268 = vmatpush.msra.mxu0 %v1246
    %1269 = vmatpush.msra.mxu0 %v1245
    %1270 = vmatpush.msra.mxu0 %v1244
    %1271 = vmatpush.msra.mxu0 %v1243
    %1272 = vmatpush.msra.mxu0 %v1242
    %1273 = vmatpush.msra.mxu0 %v1241
    %1274 = vmatpush.msra.mxu0 %v1240
    %1275 = vmatpush.msra.mxu0 %v1239
    %1276 = vmatmul.f32.gmra.mxu0 %v1237
    %v1277 = vpop.f32.mrf.mxu0
    %v1278 = vadd.f32 %v1258, %v1277
    %1279 = vdwg.mxu0
    %s1280 = scalar_lea.vmem %s3, 512
    %v1281 = vld [vmem:[%s1280] sm:$0xff]
    %v1282 = vld [vmem:[%s1280 + $0x8] sm:$0xff]
    %v1283 = vld [vmem:[%s1280 + $0x10] sm:$0xff]
    %v1284 = vld [vmem:[%s1280 + $0x18] sm:$0xff]
    %v1285 = vld [vmem:[%s1280 + $0x20] sm:$0xff]
    %v1286 = vld [vmem:[%s1280 + $0x28] sm:$0xff]
    %v1287 = vld [vmem:[%s1280 + $0x30] sm:$0xff]
    %v1288 = vld [vmem:[%s1280 + $0x38] sm:$0xff]
    %v1289 = vld [vmem:[%s1280 + $0x40] sm:$0xff]
    %v1290 = vld [vmem:[%s1280 + $0x48] sm:$0xff]
    %v1291 = vld [vmem:[%s1280 + $0x50] sm:$0xff]
    %v1292 = vld [vmem:[%s1280 + $0x58] sm:$0xff]
    %v1293 = vld [vmem:[%s1280 + $0x60] sm:$0xff]
    %v1294 = vld [vmem:[%s1280 + $0x68] sm:$0xff]
    %v1295 = vld [vmem:[%s1280 + $0x70] sm:$0xff]
    %v1296 = vld [vmem:[%s1280 + $0x78] sm:$0xff]
    %s1297 = scalar_lea.vmem [#allocation9], 4
    %v1298 = vld [vmem:[%s1297] sm:$0x1]
    %v1300 = vperm.slane %v1298, 0
    %1302 = vmatpush.msra.mxu0 %v1296
    %1303 = vmatpush.msra.mxu0 %v1295
    %1304 = vmatpush.msra.mxu0 %v1294
    %1305 = vmatpush.msra.mxu0 %v1293
    %1306 = vmatpush.msra.mxu0 %v1292
    %1307 = vmatpush.msra.mxu0 %v1291
    %1308 = vmatpush.msra.mxu0 %v1290
    %1309 = vmatpush.msra.mxu0 %v1289
    %1310 = vmatpush.msra.mxu0 %v1288
    %1311 = vmatpush.msra.mxu0 %v1287
    %1312 = vmatpush.msra.mxu0 %v1286
    %1313 = vmatpush.msra.mxu0 %v1285
    %1314 = vmatpush.msra.mxu0 %v1284
    %1315 = vmatpush.msra.mxu0 %v1283
    %1316 = vmatpush.msra.mxu0 %v1282
    %1317 = vmatpush.msra.mxu0 %v1281
    %1318 = vmatmul.f32.gmra.mxu0 %v1237
    %v1319 = vpop.f32.mrf.mxu0
    %v1320 = vadd.f32 %v1300, %v1319
    %1321 = vdwg.mxu0
    %v1322 = vsub.f32 %v1089, %v1278
    %v1323 = vadd.f32 %v1090, %v1320
    %s1324 = sshll.u32 %s161, 4
    %1325 = dma.done %s146, %s1324
    %v1326 = vld [vmem:[%s145] sm:$0xff]
    %v1327 = vld [vmem:[%s145 + $0x8] sm:$0xff]
    %v1328 = vld [vmem:[%s145 + $0x10] sm:$0x1]
    %v1329 = vperm.slane %v1328, 0
    %v1331 = vsel %vm168, %v1322, 0
    %1333 = vmatpush.msra.mxu0 0.0
    %1334 = vmatpush.msra.mxu0 0.0
    %1335 = vmatpush.msra.mxu0 0.0
    %1336 = vmatpush.msra.mxu0 0.0
    %1337 = vmatpush.msra.mxu0 0.0
    %1338 = vmatpush.msra.mxu0 0.0
    %1339 = vmatpush.msra.mxu0 0.0
    %1340 = vmatpush.msra.mxu0 0.0
    %1341 = vmatpush.msra.mxu0 0.0
    %1342 = vmatpush.msra.mxu0 0.0
    %1343 = vmatpush.msra.mxu0 0.0
    %1344 = vmatpush.msra.mxu0 0.0
    %1345 = vmatpush.msra.mxu0 0.0
    %1346 = vmatpush.msra.mxu0 0.0
    %1347 = vmatpush.msra.mxu0 %v1327
    %1348 = vmatpush.msra.mxu0 %v1326
    %1349 = vmatmul.f32.gmra.mxu0 %v1331
    %v1350 = vpop.f32.mrf.mxu0
    %v1351 = vadd.f32 %v1329, %v1350
    %1352 = vdwg.mxu0
    %v1353 = vmax.f32 %v1351, 0.0
    %v1354 = vld [vmem:[%s145 + $0x18] sm:$0xff]
    %v1355 = vld [vmem:[%s145 + $0x20] sm:$0xff]
    %v1356 = vld [vmem:[%s145 + $0x28] sm:$0xff]
    %v1357 = vld [vmem:[%s145 + $0x30] sm:$0xff]
    %v1358 = vld [vmem:[%s145 + $0x38] sm:$0xff]
    %v1359 = vld [vmem:[%s145 + $0x40] sm:$0xff]
    %v1360 = vld [vmem:[%s145 + $0x48] sm:$0xff]
    %v1361 = vld [vmem:[%s145 + $0x50] sm:$0xff]
    %v1362 = vld [vmem:[%s145 + $0x58] sm:$0xff]
    %v1363 = vld [vmem:[%s145 + $0x60] sm:$0xff]
    %v1364 = vld [vmem:[%s145 + $0x68] sm:$0xff]
    %v1365 = vld [vmem:[%s145 + $0x70] sm:$0xff]
    %v1366 = vld [vmem:[%s145 + $0x78] sm:$0xff]
    %v1367 = vld [vmem:[%s145 + $0x80] sm:$0xff]
    %v1368 = vld [vmem:[%s145 + $0x88] sm:$0xff]
    %v1369 = vld [vmem:[%s145 + $0x90] sm:$0xff]
    %v1370 = vld [vmem:[%s145 + $0x98] sm:$0x1]
    %v1371 = vperm.slane %v1370, 0
    %1372 = vmatpush.msra.mxu0 %v1369
    %1373 = vmatpush.msra.mxu0 %v1368
    %1374 = vmatpush.msra.mxu0 %v1367
    %1375 = vmatpush.msra.mxu0 %v1366
    %1376 = vmatpush.msra.mxu0 %v1365
    %1377 = vmatpush.msra.mxu0 %v1364
    %1378 = vmatpush.msra.mxu0 %v1363
    %1379 = vmatpush.msra.mxu0 %v1362
    %1380 = vmatpush.msra.mxu0 %v1361
    %1381 = vmatpush.msra.mxu0 %v1360
    %1382 = vmatpush.msra.mxu0 %v1359
    %1383 = vmatpush.msra.mxu0 %v1358
    %1384 = vmatpush.msra.mxu0 %v1357
    %1385 = vmatpush.msra.mxu0 %v1356
    %1386 = vmatpush.msra.mxu0 %v1355
    %1387 = vmatpush.msra.mxu0 %v1354
    %1388 = vmatmul.f32.gmra.mxu0 %v1353
    %v1389 = vpop.f32.mrf.mxu0
    %v1390 = vadd.f32 %v1371, %v1389
    %1391 = vdwg.mxu0
    %v1392 = vmax.f32 %v1390, 0.0
    %v1393 = vld [vmem:[%s145 + $0xa0] sm:$0xff]
    %v1394 = vld [vmem:[%s145 + $0xa8] sm:$0xff]
    %v1395 = vld [vmem:[%s145 + $0xb0] sm:$0xff]
    %v1396 = vld [vmem:[%s145 + $0xb8] sm:$0xff]
    %v1397 = vld [vmem:[%s145 + $0xc0] sm:$0xff]
    %v1398 = vld [vmem:[%s145 + $0xc8] sm:$0xff]
    %v1399 = vld [vmem:[%s145 + $0xd0] sm:$0xff]
    %v1400 = vld [vmem:[%s145 + $0xd8] sm:$0xff]
    %v1401 = vld [vmem:[%s145 + $0xe0] sm:$0xff]
    %v1402 = vld [vmem:[%s145 + $0xe8] sm:$0xff]
    %v1403 = vld [vmem:[%s145 + $0xf0] sm:$0xff]
    %v1404 = vld [vmem:[%s145 + $0xf8] sm:$0xff]
    %v1405 = vld [vmem:[%s145 + $0x100] sm:$0xff]
    %v1406 = vld [vmem:[%s145 + $0x108] sm:$0xff]
    %v1407 = vld [vmem:[%s145 + $0x110] sm:$0xff]
    %v1408 = vld [vmem:[%s145 + $0x118] sm:$0xff]
    %v1409 = vld [vmem:[%s145 + $0x120] sm:$0x1]
    %v1410 = vperm.slane %v1409, 0
    %1411 = vmatpush.msra.mxu0 %v1408
    %1412 = vmatpush.msra.mxu0 %v1407
    %1413 = vmatpush.msra.mxu0 %v1406
    %1414 = vmatpush.msra.mxu0 %v1405
    %1415 = vmatpush.msra.mxu0 %v1404
    %1416 = vmatpush.msra.mxu0 %v1403
    %1417 = vmatpush.msra.mxu0 %v1402
    %1418 = vmatpush.msra.mxu0 %v1401
    %1419 = vmatpush.msra.mxu0 %v1400
    %1420 = vmatpush.msra.mxu0 %v1399
    %1421 = vmatpush.msra.mxu0 %v1398
    %1422 = vmatpush.msra.mxu0 %v1397
    %1423 = vmatpush.msra.mxu0 %v1396
    %1424 = vmatpush.msra.mxu0 %v1395
    %1425 = vmatpush.msra.mxu0 %v1394
    %1426 = vmatpush.msra.mxu0 %v1393
    %1427 = vmatmul.f32.gmra.mxu0 %v1392
    %v1428 = vpop.f32.mrf.mxu0
    %v1429 = vadd.f32 %v1410, %v1428
    %1430 = vdwg.mxu0
    %v1431 = vmax.f32 %v1429, 0.0
    %v1432 = vld [vmem:[%s145 + $0x128] sm:$0xff]
    %v1433 = vld [vmem:[%s145 + $0x130] sm:$0xff]
    %v1434 = vld [vmem:[%s145 + $0x138] sm:$0xff]
    %v1435 = vld [vmem:[%s145 + $0x140] sm:$0xff]
    %v1436 = vld [vmem:[%s145 + $0x148] sm:$0xff]
    %v1437 = vld [vmem:[%s145 + $0x150] sm:$0xff]
    %v1438 = vld [vmem:[%s145 + $0x158] sm:$0xff]
    %v1439 = vld [vmem:[%s145 + $0x160] sm:$0xff]
    %v1440 = vld [vmem:[%s145 + $0x168] sm:$0xff]
    %v1441 = vld [vmem:[%s145 + $0x170] sm:$0xff]
    %v1442 = vld [vmem:[%s145 + $0x178] sm:$0xff]
    %v1443 = vld [vmem:[%s145 + $0x180] sm:$0xff]
    %v1444 = vld [vmem:[%s145 + $0x188] sm:$0xff]
    %v1445 = vld [vmem:[%s145 + $0x190] sm:$0xff]
    %v1446 = vld [vmem:[%s145 + $0x198] sm:$0xff]
    %v1447 = vld [vmem:[%s145 + $0x1a0] sm:$0xff]
    %v1448 = vld [vmem:[%s145 + $0x1a8] sm:$0x1]
    %v1449 = vperm.slane %v1448, 0
    %1450 = vmatpush.msra.mxu0 %v1447
    %1451 = vmatpush.msra.mxu0 %v1446
    %1452 = vmatpush.msra.mxu0 %v1445
    %1453 = vmatpush.msra.mxu0 %v1444
    %1454 = vmatpush.msra.mxu0 %v1443
    %1455 = vmatpush.msra.mxu0 %v1442
    %1456 = vmatpush.msra.mxu0 %v1441
    %1457 = vmatpush.msra.mxu0 %v1440
    %1458 = vmatpush.msra.mxu0 %v1439
    %1459 = vmatpush.msra.mxu0 %v1438
    %1460 = vmatpush.msra.mxu0 %v1437
    %1461 = vmatpush.msra.mxu0 %v1436
    %1462 = vmatpush.msra.mxu0 %v1435
    %1463 = vmatpush.msra.mxu0 %v1434
    %1464 = vmatpush.msra.mxu0 %v1433
    %1465 = vmatpush.msra.mxu0 %v1432
    %1466 = vmatmul.f32.gmra.mxu0 %v1431
    %v1467 = vpop.f32.mrf.mxu0
    %v1468 = vadd.f32 %v1449, %v1467
    %1469 = vdwg.mxu0
    %v1470 = vmax.f32 %v1468, 0.0
    %s1471 = scalar_lea.vmem %s3, 640
    %v1472 = vld [vmem:[%s1471] sm:$0xff]
    %v1473 = vld [vmem:[%s1471 + $0x8] sm:$0xff]
    %v1474 = vld [vmem:[%s1471 + $0x10] sm:$0xff]
    %v1475 = vld [vmem:[%s1471 + $0x18] sm:$0xff]
    %v1476 = vld [vmem:[%s1471 + $0x20] sm:$0xff]
    %v1477 = vld [vmem:[%s1471 + $0x28] sm:$0xff]
    %v1478 = vld [vmem:[%s1471 + $0x30] sm:$0xff]
    %v1479 = vld [vmem:[%s1471 + $0x38] sm:$0xff]
    %v1480 = vld [vmem:[%s1471 + $0x40] sm:$0xff]
    %v1481 = vld [vmem:[%s1471 + $0x48] sm:$0xff]
    %v1482 = vld [vmem:[%s1471 + $0x50] sm:$0xff]
    %v1483 = vld [vmem:[%s1471 + $0x58] sm:$0xff]
    %v1484 = vld [vmem:[%s1471 + $0x60] sm:$0xff]
    %v1485 = vld [vmem:[%s1471 + $0x68] sm:$0xff]
    %v1486 = vld [vmem:[%s1471 + $0x70] sm:$0xff]
    %v1487 = vld [vmem:[%s1471 + $0x78] sm:$0xff]
    %s1488 = scalar_lea.vmem [#allocation9], 5
    %v1489 = vld [vmem:[%s1488] sm:$0x1]
    %v1491 = vperm.slane %v1489, 0
    %1493 = vmatpush.msra.mxu0 %v1487
    %1494 = vmatpush.msra.mxu0 %v1486
    %1495 = vmatpush.msra.mxu0 %v1485
    %1496 = vmatpush.msra.mxu0 %v1484
    %1497 = vmatpush.msra.mxu0 %v1483
    %1498 = vmatpush.msra.mxu0 %v1482
    %1499 = vmatpush.msra.mxu0 %v1481
    %1500 = vmatpush.msra.mxu0 %v1480
    %1501 = vmatpush.msra.mxu0 %v1479
    %1502 = vmatpush.msra.mxu0 %v1478
    %1503 = vmatpush.msra.mxu0 %v1477
    %1504 = vmatpush.msra.mxu0 %v1476
    %1505 = vmatpush.msra.mxu0 %v1475
    %1506 = vmatpush.msra.mxu0 %v1474
    %1507 = vmatpush.msra.mxu0 %v1473
    %1508 = vmatpush.msra.mxu0 %v1472
    %1509 = vmatmul.f32.gmra.mxu0 %v1470
    %v1510 = vpop.f32.mrf.mxu0
    %v1511 = vadd.f32 %v1491, %v1510
    %1512 = vdwg.mxu0
    %v1513 = vadd.f32 %v1323, %v1511
    %vm1514 = vcmask 64512
    %1515 = vst.msk [vmem:[#allocation10] sm:$0xff] %vm1514, %v1513
    // Predicated region
    $region58: #{nbeats_forward.1} parent=1 // pred_check
      _
    $region59: #{nbeats_forward.1} parent=1 // pred_check_branch
      %1517 = sbr.rel (0) target = $region61
    $region60: #{nbeats_forward.1} parent=1 // pred_region
      %1519 = vsyncadd [#allocation6], 0
      %s1521 = sshll.u32 [#allocation10], 4
      %s1522 = int_to_ptr.vmem [resolvable:$true] %s1521
      %s1523 = sshll.u32 %s6, 4
      %s1524 = int_to_ptr.hbm [resolvable:$true] %s1523
      %1526 = dma.vmem_to_hbm [thread:$0]  %s1522, 128, %s1524, [#allocation6]
    $region61: #{nbeats_forward.1} parent=1 // pred_fallthru
      _
    // Predicated region
    $region62: #{nbeats_forward.1} parent=1 // pred_check
      _
    $region63: #{nbeats_forward.1} parent=1 // pred_check_branch
      %1528 = sbr.rel (0) target = $region65
    $region64: #{nbeats_forward.1} parent=1 // pred_region
      %1530 = dma.done [#allocation6], 128
    $region65: #{nbeats_forward.1} parent=1 // pred_fallthru
      _
    %1531 = vsyncpa [#allocation5], 1
    %1532 = vsyncpa [#allocation8], 1
    %1533 = vsyncpa [#allocation6], 1
  %1534 = vsyncmov [#allocation3]
  %s1535 = vpop.sfrf %1534
  %p1536 = scmp.eq.s32.totalorder %s1535, 0
  %p1537 = pneg %p1536
  %1539 = shalt.err (%p1537)
  %s1540 = scalar_lea.sflag [#allocation3], 1
  %1541 = vsyncmov %s1540
  %s1542 = vpop.sfrf %1541
  %p1543 = scmp.eq.s32.totalorder %s1542, 0
  %p1544 = pneg %p1543
  %1546 = shalt.err (%p1544)
  %s1547 = scalar_lea.sflag [#allocation3], 2
  %1548 = vsyncmov %s1547
  %s1549 = vpop.sfrf %1548
  %p1550 = scmp.eq.s32.totalorder %s1549, 0
  %p1551 = pneg %p1550
  %1553 = shalt.err (%p1551)
  %s1554 = scalar_lea.sflag [#allocation3], 3
  %1555 = vsyncmov %s1554
  %s1556 = vpop.sfrf %1555
  %p1557 = scmp.eq.s32.totalorder %s1556, 0
  %p1558 = pneg %p1557
  %1560 = shalt.err (%p1558)
  %s1561 = scalar_lea.sflag [#allocation3], 4
  %1562 = vsyncmov %s1561
  %s1563 = vpop.sfrf %1562
  %p1564 = scmp.eq.s32.totalorder %s1563, 0
  %p1565 = pneg %p1564
  %1567 = shalt.err (%p1565)
  %s1568 = scalar_lea.sflag [#allocation3], 5
  %1569 = vsyncmov %s1568
  %s1570 = vpop.sfrf %1569
  %p1571 = scmp.eq.s32.totalorder %s1570, 0
  %p1572 = pneg %p1571
  %1574 = shalt.err (%p1572)

</llo_original>
